<compile_context>
chip_gen: v7x
topology: tpu7x:2x2x1
jax: 0.10.0
libtpu: 0.0.40
codegen_flags: <defaults>
</compile_context>

<pallas_src>
import functools

import jax
import jax.numpy as jnp
from jax import lax
from jax.experimental import pallas as pl
from jax.experimental.pallas import tpu as pltpu

NEG_SLOPE = 0.01  # torch.nn.LeakyReLU default negative_slope


def _leaky(x):
    return jnp.where(x >= 0, x, NEG_SLOPE * x)


def _round_up(x, m):
    return ((x + m - 1) // m) * m


def classifier_kernel(patches_ref, wenc_ref, benc_ref, w1_ref, b1_ref,
                      w2_ref, b2_ref, out_ref, feat_ref):
    # patches_ref: (TB, P*K)   bf16, batch-major, lane-dense
    # wenc_ref:    (G*K, G*C)  bf16 block-diagonal encoder weight (patch group)
    # benc_ref:    (1, G*C)    f32 encoder bias, tiled per patch-in-group
    # w1_ref:      (P*C, N1p)  bf16 fc1 weight, rows permuted to p-major order
    # b1_ref:      (1, N1p)    f32
    # w2_ref:      (N1p, N2p)  bf16
    # b2_ref:      (1, N2p)    f32
    # out_ref:     (TB, N2p)   f32
    # feat_ref:    (TB, P*C)   bf16 VMEM scratch (post-relu encoder features)
    TB = patches_ref.shape[0]
    GK, GC = wenc_ref.shape
    n_groups = patches_ref.shape[1] // GK

    # Hoisted bias broadcast (JAX does not CSE broadcast_in_dim).
    benc_b = jnp.broadcast_to(benc_ref[...], (TB, GC))

    # Encoder + relu1_1, one K=G*64 block-diagonal dot per patch group, staged
    # into a bf16 VMEM scratch so fc1 can run as a single long-K contraction.
    for g in range(n_groups):  # static unroll, n_groups == P // G (== 4)
        pg = patches_ref[:, g * GK:(g + 1) * GK]
        f = jnp.dot(pg, wenc_ref[...], preferred_element_type=jnp.float32)
        f = _leaky(f + benc_b)                      # relu1_1 (f32 VPU path)
        feat_ref[:, g * GC:(g + 1) * GC] = f.astype(feat_ref.dtype)

    # fc1 + relu2_1: one K = P*C (=1024) MXU dot; Mosaic chains the accumulation
    # inside the MXU (MRB in-place accumulate on v7x) -- no vreg partial sums.
    h = jnp.dot(feat_ref[...], w1_ref[...], preferred_element_type=jnp.float32)
    h = _leaky(h + b1_ref[...])

    # fc2 (lane-padded to 128 output columns; sliced to 22 outside the kernel).
    out_ref[...] = (jnp.dot(h.astype(w2_ref.dtype), w2_ref[...],
                            preferred_element_type=jnp.float32)
                    + b2_ref[...]).astype(out_ref.dtype)


@functools.partial(jax.jit, static_argnames=("block_b", "group"))
def classifier_forward(x, conv_w, conv_b, fc1_w, fc1_b, fc2_w, fc2_b,
                       *, block_b=256, group=4):
    """x: NCHW float32, PyTorch-shaped params. Returns (B, 22) float32 logits.

    group=4 matches the 256-deep MXU of v6e/v7x; use group=2 on v5e (128-deep).
    """
    B, Cin, H, W = x.shape
    Cout, _, KH, KW = conv_w.shape
    Hb, Wb = H // KH, W // KW
    P = Hb * Wb                       # 16 patches
    K = Cin * KH * KW                 # 64 per-patch inputs
    C = Cout                          # 64 encoder channels
    N1 = fc1_w.shape[0]               # 300
    N2 = fc2_w.shape[0]               # 22
    assert P % group == 0, (P, group)
    GK, GC = group * K, group * C

    # Lane-padded FC widths (multiples of 128) -> dense MXU tiles / stores.
    N1p = _round_up(N1, 128)          # 384
    N2p = _round_up(N2, 128)          # 128

    # Batch tile: big tiles amortize the ~0.35us grid-step overhead, but keep at
    # least 2 grid steps so v7x's two TensorCores both get work.
    TB = min(block_b, _round_up(B, 8))
    B_pad = _round_up(B, TB)
    if B_pad // TB < 2 and TB >= 16:
        TB //= 2
        B_pad = _round_up(B, TB)

    # --- host-side glue: non-overlapping 4x4 patches, batch-major, bf16 ---
    patches = x.reshape(B, Cin, Hb, KH, Wb, KW)
    patches = patches.transpose(0, 2, 4, 1, 3, 5).reshape(B, P * K)
    patches = patches.astype(jnp.bfloat16)
    if B_pad != B:
        patches = jnp.pad(patches, ((0, B_pad - B), (0, 0)))

    # --- host-side glue: parameter repacking (hoist out of per-call path in prod) ---
    wenc = conv_w.reshape(C, K).T                                    # (K, C)
    wenc_bd = jnp.kron(jnp.eye(group, dtype=wenc.dtype), wenc)       # (GK, GC) block-diag
    wenc_bd = wenc_bd.astype(jnp.bfloat16)
    benc_g = jnp.tile(conv_b, group).reshape(1, GC).astype(jnp.float32)
    # PyTorch flatten index f = c*P + p  ->  kernel feature order is p-major:
    # w1p[p*C + c, n] = fc1_w[n, c*P + p]
    w1p = fc1_w.T.reshape(C, P, N1).transpose(1, 0, 2).reshape(P * C, N1)
    w1p = jnp.pad(w1p, ((0, 0), (0, N1p - N1))).astype(jnp.bfloat16)  # (1024, 384)
    b1p = jnp.pad(fc1_b.reshape(1, N1), ((0, 0), (0, N1p - N1))).astype(jnp.float32)
    w2p = jnp.pad(fc2_w.T, ((0, N1p - N1), (0, N2p - N2))).astype(jnp.bfloat16)
    b2p = jnp.pad(fc2_b.reshape(1, N2), ((0, 0), (0, N2p - N2))).astype(jnp.float32)

    out_padded = pl.pallas_call(
        classifier_kernel,
        out_shape=jax.ShapeDtypeStruct((B_pad, N2p), jnp.float32),
        grid=(B_pad // TB,),
        in_specs=[
            pl.BlockSpec((TB, P * K), lambda i: (i, 0)),   # batch-tiled, contiguous DMA
            pl.BlockSpec((GK, GC), lambda i: (0, 0)),      # resident weights
            pl.BlockSpec((1, GC), lambda i: (0, 0)),
            pl.BlockSpec((P * C, N1p), lambda i: (0, 0)),
            pl.BlockSpec((1, N1p), lambda i: (0, 0)),
            pl.BlockSpec((N1p, N2p), lambda i: (0, 0)),
            pl.BlockSpec((1, N2p), lambda i: (0, 0)),
        ],
        out_specs=pl.BlockSpec((TB, N2p), lambda i: (i, 0)),
        scratch_shapes=[pltpu.VMEM((TB, P * C), jnp.bfloat16)],
        compiler_params=pltpu.CompilerParams(
            dimension_semantics=("parallel",)),
    )(patches, wenc_bd, benc_g, w1p, b1p, w2p, b2p)

    return out_padded[:B, :N2]


def reference_forward(x, conv_w, conv_b, fc1_w, fc1_b, fc2_w, fc2_b):
    """Pure-JAX f32 reference following PyTorch semantics exactly (NCHW conv,
    channel-major flatten, Linear as x @ W.T + b)."""
    y = lax.conv_general_dilated(
        x, conv_w, window_strides=(conv_w.shape[2], conv_w.shape[3]),
        padding="VALID", dimension_numbers=("NCHW", "OIHW", "NCHW"),
        precision=lax.Precision.HIGHEST)
    y = y + conv_b[None, :, None, None]
    y = _leaky(y)                                  # relu1_1
    y = y.reshape(y.shape[0], -1)                  # view(B, -1): order (C, H, W)
    y = _leaky(jnp.dot(y, fc1_w.T, precision=lax.Precision.HIGHEST) + fc1_b)
    y = jnp.dot(y, fc2_w.T, precision=lax.Precision.HIGHEST) + fc2_b
    return y


if __name__ == "__main__":
    key = jax.random.PRNGKey(0)
    k_x, k_cw, k_cb, k_w1, k_b1, k_w2, k_b2, k_x2 = jax.random.split(key, 8)

    B, Cin, H, W = 2, 4, 16, 16
    Cout, KH, KW = 64, 4, 4
    P = (H // KH) * (W // KW)                      # 16 patches -> 64*16 = 1024 feats

    x = jax.random.normal(k_x, (B, Cin, H, W), jnp.float32)

    # PyTorch-shaped parameters (deterministic synthetic init).
    conv_w = jax.random.normal(k_cw, (Cout, Cin, KH, KW), jnp.float32) * 0.05
    conv_b = jax.random.normal(k_cb, (Cout,), jnp.float32) * 0.05
    fc1_w = jax.random.normal(k_w1, (300, 1024), jnp.float32) * 0.03   # (out, in)
    fc1_b = jax.random.normal(k_b1, (300,), jnp.float32) * 0.03
    fc2_w = jax.random.normal(k_w2, (22, 300), jnp.float32) * 0.05
    fc2_b = jax.random.normal(k_b2, (22,), jnp.float32) * 0.05

    # bf16 MXU operands with f32 accumulation -> looser tolerance vs f32 reference.
    RTOL, ATOL = 3e-2, 3e-2

    # Small-batch check (module-consistent shapes).
    out = classifier_forward(x, conv_w, conv_b, fc1_w, fc1_b, fc2_w, fc2_b)
    out = jax.block_until_ready(out)
    ref = reference_forward(x, conv_w, conv_b, fc1_w, fc1_b, fc2_w, fc2_b)
    assert out.shape == (B, 22), out.shape
    assert jnp.allclose(out, ref, rtol=RTOL, atol=ATOL), \
        float(jnp.max(jnp.abs(out - ref)))

    # Larger batch exercises the batch-tiled grid (TB=128, 2 grid steps so the
    # "parallel" axis shards across both v7x TensorCores).
    B2 = 256
    x2 = jax.random.normal(k_x2, (B2, Cin, H, W), jnp.float32)
    out2 = classifier_forward(x2, conv_w, conv_b, fc1_w, fc1_b, fc2_w, fc2_b)
    out2 = jax.block_until_ready(out2)
    ref2 = reference_forward(x2, conv_w, conv_b, fc1_w, fc1_b, fc2_w, fc2_b)
    assert out2.shape == (B2, 22), out2.shape
    assert jnp.allclose(out2, ref2, rtol=RTOL, atol=ATOL), \
        float(jnp.max(jnp.abs(out2 - ref2)))

    print("KERNEL_OK")
</pallas_src>

<mosaic_0001>
module attributes {stable_mosaic.version = 11 : i64} {
  func.func @classifier_kernel(%arg0: i32, %arg1: memref<8x1024xbf16, #tpu.memory_space<vmem>>, %arg2: memref<256x256xbf16, #tpu.memory_space<vmem>>, %arg3: memref<1x256xf32, #tpu.memory_space<vmem>>, %arg4: memref<1024x384xbf16, #tpu.memory_space<vmem>>, %arg5: memref<1x384xf32, #tpu.memory_space<vmem>>, %arg6: memref<384x128xbf16, #tpu.memory_space<vmem>>, %arg7: memref<1x128xf32, #tpu.memory_space<vmem>>, %arg8: memref<8x128xf32, #tpu.memory_space<vmem>>, %arg9: memref<8x1024xbf16, #tpu.memory_space<vmem>>) attributes {dimension_semantics = [#tpu.dimension_semantics<parallel>], iteration_bounds = array<i64: 1>, scalar_prefetch = 0 : i64, scratch_operands = 1 : i64, tpu.core_type = #tpu.core_type<tc>, window_params = [{transform_indices = @transform_0, window_bounds = array<i64: 8, 1024>}, {pipeline_mode = #tpu.pipeline_mode<synchronous>, transform_indices = @transform_1, window_bounds = array<i64: 256, 256>}, {pipeline_mode = #tpu.pipeline_mode<synchronous>, transform_indices = @transform_2, window_bounds = array<i64: 1, 256>}, {pipeline_mode = #tpu.pipeline_mode<synchronous>, transform_indices = @transform_3, window_bounds = array<i64: 1024, 384>}, {pipeline_mode = #tpu.pipeline_mode<synchronous>, transform_indices = @transform_4, window_bounds = array<i64: 1, 384>}, {pipeline_mode = #tpu.pipeline_mode<synchronous>, transform_indices = @transform_5, window_bounds = array<i64: 384, 128>}, {pipeline_mode = #tpu.pipeline_mode<synchronous>, transform_indices = @transform_6, window_bounds = array<i64: 1, 128>}, {transform_indices = @transform_7, window_bounds = array<i64: 8, 128>}]} {
    %c0 = arith.constant 0 : index
    %c0_0 = arith.constant 0 : index
    %0 = vector.load %arg3[%c0, %c0_0] : memref<1x256xf32, #tpu.memory_space<vmem>>, vector<1x256xf32>
    %1 = vector.shape_cast %0 : vector<1x256xf32> to vector<1x256xf32>
    %2 = vector.broadcast %1 : vector<1x256xf32> to vector<8x256xf32>
    %c0_1 = arith.constant 0 : index
    %c0_2 = arith.constant 0 : index
    %3 = vector.load %arg1[%c0_1, %c0_2] : memref<8x1024xbf16, #tpu.memory_space<vmem>>, vector<8x256xbf16>
    %c0_3 = arith.constant 0 : index
    %c0_4 = arith.constant 0 : index
    %4 = vector.load %arg2[%c0_3, %c0_4] : memref<256x256xbf16, #tpu.memory_space<vmem>>, vector<256x256xbf16>
    %cst = arith.constant dense<0.000000e+00> : vector<8x256xf32>
    %5 = tpu.matmul %3, %4, %cst {dimension_numbers = #tpu.dot_dimension_numbers<[1], [0], [0], [1], [0, 0, 1, 1], [], []>} : vector<8x256xbf16>, vector<256x256xbf16>, vector<8x256xf32> -> vector<8x256xf32>
    %6 = arith.addf %5, %2 : vector<8x256xf32>
    %cst_5 = arith.constant 0.000000e+00 : f32
    %7 = vector.broadcast %cst_5 : f32 to vector<8x256xf32>
    %8 = arith.cmpf oge, %6, %7 : vector<8x256xf32>
    %cst_6 = arith.constant 0.00999999977 : f32
    %9 = vector.broadcast %cst_6 : f32 to vector<8x256xf32>
    %10 = arith.mulf %9, %6 : vector<8x256xf32>
    %11 = arith.select %8, %6, %10 : vector<8x256xi1>, vector<8x256xf32>
    %12 = arith.truncf %11 : vector<8x256xf32> to vector<8x256xbf16>
    %c0_7 = arith.constant 0 : index
    %c0_8 = arith.constant 0 : index
    %13 = vector.load %arg9[%c0_7, %c0_8] : memref<8x1024xbf16, #tpu.memory_space<vmem>>, vector<8x256xbf16>
    tpu.vector_store %arg9[%c0_7, %c0_8], %12 {strides = array<i32>} : memref<8x1024xbf16, #tpu.memory_space<vmem>>, vector<8x256xbf16>,
    %c0_9 = arith.constant 0 : index
    %c256 = arith.constant 256 : index
    %14 = vector.load %arg1[%c0_9, %c256] : memref<8x1024xbf16, #tpu.memory_space<vmem>>, vector<8x256xbf16>
    %c0_10 = arith.constant 0 : index
    %c0_11 = arith.constant 0 : index
    %15 = vector.load %arg2[%c0_10, %c0_11] : memref<256x256xbf16, #tpu.memory_space<vmem>>, vector<256x256xbf16>
    %cst_12 = arith.constant dense<0.000000e+00> : vector<8x256xf32>
    %16 = tpu.matmul %14, %15, %cst_12 {dimension_numbers = #tpu.dot_dimension_numbers<[1], [0], [0], [1], [0, 0, 1, 1], [], []>} : vector<8x256xbf16>, vector<256x256xbf16>, vector<8x256xf32> -> vector<8x256xf32>
    %17 = arith.addf %16, %2 : vector<8x256xf32>
    %cst_13 = arith.constant 0.000000e+00 : f32
    %18 = vector.broadcast %cst_13 : f32 to vector<8x256xf32>
    %19 = arith.cmpf oge, %17, %18 : vector<8x256xf32>
    %cst_14 = arith.constant 0.00999999977 : f32
    %20 = vector.broadcast %cst_14 : f32 to vector<8x256xf32>
    %21 = arith.mulf %20, %17 : vector<8x256xf32>
    %22 = arith.select %19, %17, %21 : vector<8x256xi1>, vector<8x256xf32>
    %23 = arith.truncf %22 : vector<8x256xf32> to vector<8x256xbf16>
    %c0_15 = arith.constant 0 : index
    %c256_16 = arith.constant 256 : index
    %24 = vector.load %arg9[%c0_15, %c256_16] : memref<8x1024xbf16, #tpu.memory_space<vmem>>, vector<8x256xbf16>
    tpu.vector_store %arg9[%c0_15, %c256_16], %23 {strides = array<i32>} : memref<8x1024xbf16, #tpu.memory_space<vmem>>, vector<8x256xbf16>,
    %c0_17 = arith.constant 0 : index
    %c512 = arith.constant 512 : index
    %25 = vector.load %arg1[%c0_17, %c512] : memref<8x1024xbf16, #tpu.memory_space<vmem>>, vector<8x256xbf16>
    %c0_18 = arith.constant 0 : index
    %c0_19 = arith.constant 0 : index
    %26 = vector.load %arg2[%c0_18, %c0_19] : memref<256x256xbf16, #tpu.memory_space<vmem>>, vector<256x256xbf16>
    %cst_20 = arith.constant dense<0.000000e+00> : vector<8x256xf32>
    %27 = tpu.matmul %25, %26, %cst_20 {dimension_numbers = #tpu.dot_dimension_numbers<[1], [0], [0], [1], [0, 0, 1, 1], [], []>} : vector<8x256xbf16>, vector<256x256xbf16>, vector<8x256xf32> -> vector<8x256xf32>
    %28 = arith.addf %27, %2 : vector<8x256xf32>
    %cst_21 = arith.constant 0.000000e+00 : f32
    %29 = vector.broadcast %cst_21 : f32 to vector<8x256xf32>
    %30 = arith.cmpf oge, %28, %29 : vector<8x256xf32>
    %cst_22 = arith.constant 0.00999999977 : f32
    %31 = vector.broadcast %cst_22 : f32 to vector<8x256xf32>
    %32 = arith.mulf %31, %28 : vector<8x256xf32>
    %33 = arith.select %30, %28, %32 : vector<8x256xi1>, vector<8x256xf32>
    %34 = arith.truncf %33 : vector<8x256xf32> to vector<8x256xbf16>
    %c0_23 = arith.constant 0 : index
    %c512_24 = arith.constant 512 : index
    %35 = vector.load %arg9[%c0_23, %c512_24] : memref<8x1024xbf16, #tpu.memory_space<vmem>>, vector<8x256xbf16>
    tpu.vector_store %arg9[%c0_23, %c512_24], %34 {strides = array<i32>} : memref<8x1024xbf16, #tpu.memory_space<vmem>>, vector<8x256xbf16>,
    %c0_25 = arith.constant 0 : index
    %c768 = arith.constant 768 : index
    %36 = vector.load %arg1[%c0_25, %c768] : memref<8x1024xbf16, #tpu.memory_space<vmem>>, vector<8x256xbf16>
    %c0_26 = arith.constant 0 : index
    %c0_27 = arith.constant 0 : index
    %37 = vector.load %arg2[%c0_26, %c0_27] : memref<256x256xbf16, #tpu.memory_space<vmem>>, vector<256x256xbf16>
    %cst_28 = arith.constant dense<0.000000e+00> : vector<8x256xf32>
    %38 = tpu.matmul %36, %37, %cst_28 {dimension_numbers = #tpu.dot_dimension_numbers<[1], [0], [0], [1], [0, 0, 1, 1], [], []>} : vector<8x256xbf16>, vector<256x256xbf16>, vector<8x256xf32> -> vector<8x256xf32>
    %39 = arith.addf %38, %2 : vector<8x256xf32>
    %cst_29 = arith.constant 0.000000e+00 : f32
    %40 = vector.broadcast %cst_29 : f32 to vector<8x256xf32>
    %41 = arith.cmpf oge, %39, %40 : vector<8x256xf32>
    %cst_30 = arith.constant 0.00999999977 : f32
    %42 = vector.broadcast %cst_30 : f32 to vector<8x256xf32>
    %43 = arith.mulf %42, %39 : vector<8x256xf32>
    %44 = arith.select %41, %39, %43 : vector<8x256xi1>, vector<8x256xf32>
    %45 = arith.truncf %44 : vector<8x256xf32> to vector<8x256xbf16>
    %c0_31 = arith.constant 0 : index
    %c768_32 = arith.constant 768 : index
    %46 = vector.load %arg9[%c0_31, %c768_32] : memref<8x1024xbf16, #tpu.memory_space<vmem>>, vector<8x256xbf16>
    tpu.vector_store %arg9[%c0_31, %c768_32], %45 {strides = array<i32>} : memref<8x1024xbf16, #tpu.memory_space<vmem>>, vector<8x256xbf16>,
    %c0_33 = arith.constant 0 : index
    %c0_34 = arith.constant 0 : index
    %47 = vector.load %arg9[%c0_33, %c0_34] : memref<8x1024xbf16, #tpu.memory_space<vmem>>, vector<8x1024xbf16>
    %c0_35 = arith.constant 0 : index
    %c0_36 = arith.constant 0 : index
    %48 = vector.load %arg4[%c0_35, %c0_36] : memref<1024x384xbf16, #tpu.memory_space<vmem>>, vector<1024x384xbf16>
    %cst_37 = arith.constant dense<0.000000e+00> : vector<8x384xf32>
    %49 = tpu.matmul %47, %48, %cst_37 {dimension_numbers = #tpu.dot_dimension_numbers<[1], [0], [0], [1], [0, 0, 1, 1], [], []>} : vector<8x1024xbf16>, vector<1024x384xbf16>, vector<8x384xf32> -> vector<8x384xf32>
    %c0_38 = arith.constant 0 : index
    %c0_39 = arith.constant 0 : index
    %50 = vector.load %arg5[%c0_38, %c0_39] : memref<1x384xf32, #tpu.memory_space<vmem>>, vector<1x384xf32>
    %51 = vector.broadcast %50 : vector<1x384xf32> to vector<8x384xf32>
    %52 = arith.addf %49, %51 : vector<8x384xf32>
    %cst_40 = arith.constant 0.000000e+00 : f32
    %53 = vector.broadcast %cst_40 : f32 to vector<8x384xf32>
    %54 = arith.cmpf oge, %52, %53 : vector<8x384xf32>
    %cst_41 = arith.constant 0.00999999977 : f32
    %55 = vector.broadcast %cst_41 : f32 to vector<8x384xf32>
    %56 = arith.mulf %55, %52 : vector<8x384xf32>
    %57 = arith.select %54, %52, %56 : vector<8x384xi1>, vector<8x384xf32>
    %58 = arith.truncf %57 : vector<8x384xf32> to vector<8x384xbf16>
    %c0_42 = arith.constant 0 : index
    %c0_43 = arith.constant 0 : index
    %59 = vector.load %arg6[%c0_42, %c0_43] : memref<384x128xbf16, #tpu.memory_space<vmem>>, vector<384x128xbf16>
    %cst_44 = arith.constant dense<0.000000e+00> : vector<8x128xf32>
    %60 = tpu.matmul %58, %59, %cst_44 {dimension_numbers = #tpu.dot_dimension_numbers<[1], [0], [0], [1], [0, 0, 1, 1], [], []>} : vector<8x384xbf16>, vector<384x128xbf16>, vector<8x128xf32> -> vector<8x128xf32>
    %c0_45 = arith.constant 0 : index
    %c0_46 = arith.constant 0 : index
    %61 = vector.load %arg7[%c0_45, %c0_46] : memref<1x128xf32, #tpu.memory_space<vmem>>, vector<1x128xf32>
    %62 = vector.broadcast %61 : vector<1x128xf32> to vector<8x128xf32>
    %63 = arith.addf %60, %62 : vector<8x128xf32>
    %c0_47 = arith.constant 0 : index
    %c0_48 = arith.constant 0 : index
    %64 = vector.load %arg8[%c0_47, %c0_48] : memref<8x128xf32, #tpu.memory_space<vmem>>, vector<8x128xf32>
    tpu.vector_store %arg8[%c0_47, %c0_48], %63 {strides = array<i32>} : memref<8x128xf32, #tpu.memory_space<vmem>>, vector<8x128xf32>,
    return
  }
  func.func @transform_0(%arg0: i32) -> (i32, i32) {
    %c0_i32 = arith.constant 0 : i32
    %c0_i32_0 = arith.constant 0 : i32
    return %arg0, %c0_i32 : i32, i32
  }
  func.func @transform_1(%arg0: i32) -> (i32, i32) {
    %c0_i32 = arith.constant 0 : i32
    %c0_i32_0 = arith.constant 0 : i32
    %c0_i32_1 = arith.constant 0 : i32
    return %c0_i32, %c0_i32_0 : i32, i32
  }
  func.func @transform_2(%arg0: i32) -> (i32, i32) {
    %c0_i32 = arith.constant 0 : i32
    %c0_i32_0 = arith.constant 0 : i32
    %c0_i32_1 = arith.constant 0 : i32
    return %c0_i32, %c0_i32_0 : i32, i32
  }
  func.func @transform_3(%arg0: i32) -> (i32, i32) {
    %c0_i32 = arith.constant 0 : i32
    %c0_i32_0 = arith.constant 0 : i32
    %c0_i32_1 = arith.constant 0 : i32
    return %c0_i32, %c0_i32_0 : i32, i32
  }
  func.func @transform_4(%arg0: i32) -> (i32, i32) {
    %c0_i32 = arith.constant 0 : i32
    %c0_i32_0 = arith.constant 0 : i32
    %c0_i32_1 = arith.constant 0 : i32
    return %c0_i32, %c0_i32_0 : i32, i32
  }
  func.func @transform_5(%arg0: i32) -> (i32, i32) {
    %c0_i32 = arith.constant 0 : i32
    %c0_i32_0 = arith.constant 0 : i32
    %c0_i32_1 = arith.constant 0 : i32
    return %c0_i32, %c0_i32_0 : i32, i32
  }
  func.func @transform_6(%arg0: i32) -> (i32, i32) {
    %c0_i32 = arith.constant 0 : i32
    %c0_i32_0 = arith.constant 0 : i32
    %c0_i32_1 = arith.constant 0 : i32
    return %c0_i32, %c0_i32_0 : i32, i32
  }
  func.func @transform_7(%arg0: i32) -> (i32, i32) {
    %c0_i32 = arith.constant 0 : i32
    %c0_i32_0 = arith.constant 0 : i32
    return %arg0, %c0_i32 : i32, i32
  }
}

</mosaic_0001>

<llo_original>
// kernel: tile.8
$region0: #{tile.8}
  #allocation0 [shape = 's32[1]{0}', space=sflag, size = 0x4, scoped, tag = 'scoped memory for tile.8']
  %s0 = inlined_call_operand.vmem [shape: f32[64], index: 0, kind: input, shape index: {}]
  %s1 = inlined_call_operand.vmem [shape: f32[4,64], index: 1, kind: output, shape index: {}]
  // Predicated region
  $region2: #{tile.8} parent=0 // pred_check
    _
  $region3: #{tile.8} parent=0 // pred_check_branch
    %3 = sbr.rel (0) target = $region5
  $region4: #{tile.8} parent=0 // pred_region
    _
  $region5: #{tile.8} parent=0 // pred_fallthru
    _
  %v4 = vld [vmem:[%s0] ss:$0 sm:$0xff]
  %5 = vst [vmem:[%s1] sm:$0xf] %v4

// kernel: tile.9
$region0: #{tile.9}
  %s0 = inlined_call_operand.vmem [shape: f32[4,64], index: 0, kind: input, shape index: {}]
  %s1 = inlined_call_operand.vmem [shape: f32[1,256], index: 1, kind: output, shape index: {}]
  $region1: #{tile.9} parent=0
    #allocation0 [shape = 'u8[8192]{0}', space=vmem, size = 0x2000, scoped, tag = 'scoped mem for output reshape']
    #allocation1 [shape = 'u8[4096]{0}', space=vmem, size = 0x1000, scoped, tag = 'scoped mem for input reshape']
    %s3 = sshllo.u32 0, 4
    %v4 = vld [vmem:[%s0] sm:%s3]
    %5 = vst [vmem:[#allocation1] sm:%s3] %v4
    %s6 = smov 3
    %v7 = vld [vmem:[#allocation1] ss:$2 sm:%s6]
    %vm8 = vcmask 523264
    %9 = vst.msk [vmem:[#allocation0] ss:$8 sm:$0x3] %vm8, %v7
    %s10 = scalar_lea.vmem [#allocation1], 1
    %s11 = smov 3
    %v12 = vld [vmem:[%s10] ss:$2 sm:%s11]
    %13 = vrot.lane.b32.xlu0 %v12, 64
    %v14 = vpop.permute.xlu0 %13
    %vm15 = vcmask 1048064
    %16 = vst.msk [vmem:[#allocation0] ss:$8 sm:$0x3] %vm15, %v14
    %s18 = sshllo.u32 0, 1
    %v20 = vld [vmem:[#allocation0] sm:%s18]
    %s21 = sshllo.u32 0, 1
    %22 = vst [vmem:[%s1] sm:%s21] %v20
    %s23 = scalar_lea.vmem [#allocation0], 8
    %v24 = vld [vmem:[%s23] sm:%s18]
    %s25 = sshllo.u32 0, 1
    %s26 = scalar_lea.vmem %s1, 1
    %27 = vst [vmem:[%s26] sm:%s25] %v24

// kernel: classifier_forward.1
$region0: #{classifier_forward.1}
  #allocation0 [shape = 'u32[]', space=smem, size = 0x4, offset = 0x4, fixed_abs, tag = 'smem constant byte address 0x4 - core index']
  #allocation1 [shape = 'u32[144,128]{1,0:T(1,128)}', space=vmem, size = 0x12000, scoped, tag = 'internal scratch']
  #allocation2 [shape = 'bf16[8,1024]{1,0:T(8,128)(2,1)}', space=vmem, size = 0x4000, scoped, tag = 'scratch operand']
  %s0 = inlined_call_operand.vmem [shape: bf16[8,1024], index: 0, kind: input, shape index: {}]
  %s1 = inlined_call_operand.vmem [shape: bf16[256,256], index: 1, kind: input, shape index: {}]
  %s2 = inlined_call_operand.vmem [shape: f32[1,256], index: 2, kind: input, shape index: {}]
  %s3 = inlined_call_operand.vmem [shape: bf16[1024,384], index: 3, kind: input, shape index: {}]
  %s4 = inlined_call_operand.vmem [shape: f32[1,384], index: 4, kind: input, shape index: {}]
  %s5 = inlined_call_operand.vmem [shape: bf16[384,128], index: 5, kind: input, shape index: {}]
  %s6 = inlined_call_operand.vmem [shape: f32[1,128], index: 6, kind: input, shape index: {}]
  %s7 = inlined_call_operand.vmem [shape: f32[8,128], index: 7, kind: output, shape index: {}]
  %s8 = sld [smem:[#allocation0]]
  $region38: #{classifier_forward.1} parent=0
    _
  %s10 = ssub.s32 1, %s8
  %s11 = scalar_select 0, %s10, %s8
  // Predicated region
  $region2: #{classifier_forward.1} parent=0 // pred_check
    _
  $region3: #{classifier_forward.1} parent=0 // pred_check_branch
    %13 = sbr.rel (0) target = $region5
  $region4: #{classifier_forward.1} parent=0 // pred_region
    _
  $region5: #{classifier_forward.1} parent=0 // pred_fallthru
    _
  // Predicated region
  $region6: #{classifier_forward.1} parent=0 // pred_check
    _
  $region7: #{classifier_forward.1} parent=0 // pred_check_branch
    %15 = sbr.rel (0) target = $region9
  $region8: #{classifier_forward.1} parent=0 // pred_region
    _
  $region9: #{classifier_forward.1} parent=0 // pred_fallthru
    _
  // Predicated region
  $region10: #{classifier_forward.1} parent=0 // pred_check
    _
  $region11: #{classifier_forward.1} parent=0 // pred_check_branch
    %17 = sbr.rel (0) target = $region13
  $region12: #{classifier_forward.1} parent=0 // pred_region
    _
  $region13: #{classifier_forward.1} parent=0 // pred_fallthru
    _
  // Predicated region
  $region14: #{classifier_forward.1} parent=0 // pred_check
    _
  $region15: #{classifier_forward.1} parent=0 // pred_check_branch
    %19 = sbr.rel (0) target = $region17
  $region16: #{classifier_forward.1} parent=0 // pred_region
    _
  $region17: #{classifier_forward.1} parent=0 // pred_fallthru
    _
  // Predicated region
  $region18: #{classifier_forward.1} parent=0 // pred_check
    _
  $region19: #{classifier_forward.1} parent=0 // pred_check_branch
    %21 = sbr.rel (0) target = $region21
  $region20: #{classifier_forward.1} parent=0 // pred_region
    _
  $region21: #{classifier_forward.1} parent=0 // pred_fallthru
    _
  // Predicated region
  $region22: #{classifier_forward.1} parent=0 // pred_check
    _
  $region23: #{classifier_forward.1} parent=0 // pred_check_branch
    %23 = sbr.rel (0) target = $region25
  $region24: #{classifier_forward.1} parent=0 // pred_region
    _
  $region25: #{classifier_forward.1} parent=0 // pred_fallthru
    _
  // Predicated region
  $region26: #{classifier_forward.1} parent=0 // pred_check
    _
  $region27: #{classifier_forward.1} parent=0 // pred_check_branch
    %25 = sbr.rel (0) target = $region29
  $region28: #{classifier_forward.1} parent=0 // pred_region
    _
  $region29: #{classifier_forward.1} parent=0 // pred_fallthru
    _
  %v27 = vld [vmem:[%s2] sm:$0x3]
  %v29 = vlaneseq
  %v30 = vshrl.u32 %v29, 7
  %v31 = vsub.s32 0, %v30
  %v32 = vrot.slane %v27, %v31
  %v33 = vlaneseq
  %v34 = vshrl.u32 %v33, 7
  %v35 = vsub.s32 1, %v34
  %v36 = vrot.slane %v27, %v35
  %v39 = vld [vmem:[%s0] sm:$0xff]
  %v40 = vld [vmem:[%s1] sm:$0xff]
  %v41 = vld [vmem:[%s1 + $0x8] sm:$0xff]
  %v42 = vld [vmem:[%s1 + $0x10] sm:$0xff]
  %v43 = vld [vmem:[%s1 + $0x18] sm:$0xff]
  %v44 = vld [vmem:[%s1 + $0x20] sm:$0xff]
  %v45 = vld [vmem:[%s1 + $0x28] sm:$0xff]
  %v46 = vld [vmem:[%s1 + $0x30] sm:$0xff]
  %v47 = vld [vmem:[%s1 + $0x38] sm:$0xff]
  %v48 = vld [vmem:[%s1 + $0x40] sm:$0xff]
  %v49 = vld [vmem:[%s1 + $0x48] sm:$0xff]
  %v50 = vld [vmem:[%s1 + $0x50] sm:$0xff]
  %v51 = vld [vmem:[%s1 + $0x58] sm:$0xff]
  %v52 = vld [vmem:[%s1 + $0x60] sm:$0xff]
  %v53 = vld [vmem:[%s1 + $0x68] sm:$0xff]
  %v54 = vld [vmem:[%s1 + $0x70] sm:$0xff]
  %v55 = vld [vmem:[%s1 + $0x78] sm:$0xff]
  %v56 = vld [vmem:[%s1 + $0x80] sm:$0xff]
  %v57 = vld [vmem:[%s1 + $0x88] sm:$0xff]
  %v58 = vld [vmem:[%s1 + $0x90] sm:$0xff]
  %v59 = vld [vmem:[%s1 + $0x98] sm:$0xff]
  %v60 = vld [vmem:[%s1 + $0xa0] sm:$0xff]
  %v61 = vld [vmem:[%s1 + $0xa8] sm:$0xff]
  %v62 = vld [vmem:[%s1 + $0xb0] sm:$0xff]
  %v63 = vld [vmem:[%s1 + $0xb8] sm:$0xff]
  %v64 = vld [vmem:[%s1 + $0xc0] sm:$0xff]
  %v65 = vld [vmem:[%s1 + $0xc8] sm:$0xff]
  %v66 = vld [vmem:[%s1 + $0xd0] sm:$0xff]
  %v67 = vld [vmem:[%s1 + $0xd8] sm:$0xff]
  %v68 = vld [vmem:[%s1 + $0xe0] sm:$0xff]
  %v69 = vld [vmem:[%s1 + $0xe8] sm:$0xff]
  %v70 = vld [vmem:[%s1 + $0xf0] sm:$0xff]
  %v71 = vld [vmem:[%s1 + $0xf8] sm:$0xff]
  %v73 = vunpack.c.l.b16 %v39
  %v74 = vunpack.c.h.b16 %v39
  %v75 = vpack.c.b16 %v73, %v73
  %v76 = vpack.c.b16 %v74, %v74
  %v111 = vunpack.c.l.b16 %v40
  %v112 = vunpack.c.h.b16 %v40
  %v113 = vunpack.c.l.b16 %v41
  %v114 = vunpack.c.h.b16 %v41
  %v115 = vunpack.c.l.b16 %v42
  %v116 = vunpack.c.h.b16 %v42
  %v117 = vunpack.c.l.b16 %v43
  %v118 = vunpack.c.h.b16 %v43
  %v119 = vunpack.c.l.b16 %v44
  %v120 = vunpack.c.h.b16 %v44
  %v121 = vunpack.c.l.b16 %v45
  %v122 = vunpack.c.h.b16 %v45
  %v123 = vunpack.c.l.b16 %v46
  %v124 = vunpack.c.h.b16 %v46
  %v125 = vunpack.c.l.b16 %v47
  %v126 = vunpack.c.h.b16 %v47
  %v127 = vunpack.c.l.b16 %v48
  %v128 = vunpack.c.h.b16 %v48
  %v129 = vunpack.c.l.b16 %v49
  %v130 = vunpack.c.h.b16 %v49
  %v131 = vunpack.c.l.b16 %v50
  %v132 = vunpack.c.h.b16 %v50
  %v133 = vunpack.c.l.b16 %v51
  %v134 = vunpack.c.h.b16 %v51
  %v135 = vunpack.c.l.b16 %v52
  %v136 = vunpack.c.h.b16 %v52
  %v137 = vunpack.c.l.b16 %v53
  %v138 = vunpack.c.h.b16 %v53
  %v139 = vunpack.c.l.b16 %v54
  %v140 = vunpack.c.h.b16 %v54
  %v141 = vunpack.c.l.b16 %v55
  %v142 = vunpack.c.h.b16 %v55
  %v143 = vunpack.c.l.b16 %v56
  %v144 = vunpack.c.h.b16 %v56
  %v145 = vunpack.c.l.b16 %v57
  %v146 = vunpack.c.h.b16 %v57
  %v147 = vunpack.c.l.b16 %v58
  %v148 = vunpack.c.h.b16 %v58
  %v149 = vunpack.c.l.b16 %v59
  %v150 = vunpack.c.h.b16 %v59
  %v151 = vunpack.c.l.b16 %v60
  %v152 = vunpack.c.h.b16 %v60
  %v153 = vunpack.c.l.b16 %v61
  %v154 = vunpack.c.h.b16 %v61
  %v155 = vunpack.c.l.b16 %v62
  %v156 = vunpack.c.h.b16 %v62
  %v157 = vunpack.c.l.b16 %v63
  %v158 = vunpack.c.h.b16 %v63
  %v159 = vunpack.c.l.b16 %v64
  %v160 = vunpack.c.h.b16 %v64
  %v161 = vunpack.c.l.b16 %v65
  %v162 = vunpack.c.h.b16 %v65
  %v163 = vunpack.c.l.b16 %v66
  %v164 = vunpack.c.h.b16 %v66
  %v165 = vunpack.c.l.b16 %v67
  %v166 = vunpack.c.h.b16 %v67
  %v167 = vunpack.c.l.b16 %v68
  %v168 = vunpack.c.h.b16 %v68
  %v169 = vunpack.c.l.b16 %v69
  %v170 = vunpack.c.h.b16 %v69
  %v171 = vunpack.c.l.b16 %v70
  %v172 = vunpack.c.h.b16 %v70
  %v173 = vunpack.c.l.b16 %v71
  %v174 = vunpack.c.h.b16 %v71
  %v175 = vpack.c.b16 %v113, %v111
  %v176 = vpack.c.b16 %v114, %v112
  %v177 = vpack.c.b16 %v117, %v115
  %v178 = vpack.c.b16 %v118, %v116
  %v179 = vpack.c.b16 %v121, %v119
  %v180 = vpack.c.b16 %v122, %v120
  %v181 = vpack.c.b16 %v125, %v123
  %v182 = vpack.c.b16 %v126, %v124
  %v183 = vpack.c.b16 %v129, %v127
  %v184 = vpack.c.b16 %v130, %v128
  %v185 = vpack.c.b16 %v133, %v131
  %v186 = vpack.c.b16 %v134, %v132
  %v187 = vpack.c.b16 %v137, %v135
  %v188 = vpack.c.b16 %v138, %v136
  %v189 = vpack.c.b16 %v141, %v139
  %v190 = vpack.c.b16 %v142, %v140
  %v191 = vpack.c.b16 %v145, %v143
  %v192 = vpack.c.b16 %v146, %v144
  %v193 = vpack.c.b16 %v149, %v147
  %v194 = vpack.c.b16 %v150, %v148
  %v195 = vpack.c.b16 %v153, %v151
  %v196 = vpack.c.b16 %v154, %v152
  %v197 = vpack.c.b16 %v157, %v155
  %v198 = vpack.c.b16 %v158, %v156
  %v199 = vpack.c.b16 %v161, %v159
  %v200 = vpack.c.b16 %v162, %v160
  %v201 = vpack.c.b16 %v165, %v163
  %v202 = vpack.c.b16 %v166, %v164
  %v203 = vpack.c.b16 %v169, %v167
  %v204 = vpack.c.b16 %v170, %v168
  %v205 = vpack.c.b16 %v173, %v171
  %v206 = vpack.c.b16 %v174, %v172
  %239 = vmatprep.subr.bf16.mxu0 %v176
  %240 = vmatpush1.bf16.msra.mxu0 %v175
  %241 = vmatprep.subr.bf16.mxu0 %v178
  %242 = vmatpush1.bf16.msra.mxu0 %v177
  %243 = vmatprep.subr.bf16.mxu0 %v180
  %244 = vmatpush1.bf16.msra.mxu0 %v179
  %245 = vmatprep.subr.bf16.mxu0 %v182
  %246 = vmatpush1.bf16.msra.mxu0 %v181
  %247 = vmatprep.subr.bf16.mxu0 %v184
  %248 = vmatpush1.bf16.msra.mxu0 %v183
  %249 = vmatprep.subr.bf16.mxu0 %v186
  %250 = vmatpush1.bf16.msra.mxu0 %v185
  %251 = vmatprep.subr.bf16.mxu0 %v188
  %252 = vmatpush1.bf16.msra.mxu0 %v187
  %253 = vmatprep.subr.bf16.mxu0 %v190
  %254 = vmatpush1.bf16.msra.mxu0 %v189
  %255 = vmatprep.subr.bf16.mxu0 %v192
  %256 = vmatpush1.bf16.msra.mxu0 %v191
  %257 = vmatprep.subr.bf16.mxu0 %v194
  %258 = vmatpush1.bf16.msra.mxu0 %v193
  %259 = vmatprep.subr.bf16.mxu0 %v196
  %260 = vmatpush1.bf16.msra.mxu0 %v195
  %261 = vmatprep.subr.bf16.mxu0 %v198
  %262 = vmatpush1.bf16.msra.mxu0 %v197
  %263 = vmatprep.subr.bf16.mxu0 %v200
  %264 = vmatpush1.bf16.msra.mxu0 %v199
  %265 = vmatprep.subr.bf16.mxu0 %v202
  %266 = vmatpush1.bf16.msra.mxu0 %v201
  %267 = vmatprep.subr.bf16.mxu0 %v204
  %268 = vmatpush1.bf16.msra.mxu0 %v203
  %269 = vmatprep.subr.bf16.mxu0 %v206
  %270 = vmatpush1.bf16.msra.mxu0 %v205
  %271 = vmatprep.mubr.bf16.mxu0 %v76
  %272 = vmatmul.mubr.bf16.gmra.mrb[0].mxu0 %v75
  %v273 = vpop.f32.mrb[0].mxu0
  %v274 = vadd.f32 %v32, %v273
  %v275 = vpop.f32.mrb[0].mxu0
  %v276 = vadd.f32 %v36, %v275
  %v277 = vpop.f32.mrb[0].mxu0
  %v278 = vpop.f32.mrb[0].mxu0
  %279 = vdwg.mxu0
  %vm280 = vcmp.ge.f32.partialorder %v274, 0.0
  %vm281 = vcmp.ge.f32.partialorder %v276, 0.0
  %v282 = vmul.f32 %v274, 0.01
  %v283 = vmul.f32 %v276, 0.01
  %v284 = vsel %vm280, %v274, %v282
  %v285 = vsel %vm281, %v276, %v283
  %v286 = vpack.c.bf16 %v284, %v284
  %v287 = vpack.c.bf16 %v285, %v285
  %v290 = vunpack.c.l.b16 %v286
  %v291 = vunpack.c.l.b16 %v287
  %v292 = vpack.c.b16 %v291, %v290
  %294 = vst [vmem:[#allocation2] sm:$0xff] %v292
  %v295 = vld [vmem:[%s0 + $0x8] sm:$0xff]
  %v296 = vld [vmem:[%s1] sm:$0xff]
  %v297 = vld [vmem:[%s1 + $0x8] sm:$0xff]
  %v298 = vld [vmem:[%s1 + $0x10] sm:$0xff]
  %v299 = vld [vmem:[%s1 + $0x18] sm:$0xff]
  %v300 = vld [vmem:[%s1 + $0x20] sm:$0xff]
  %v301 = vld [vmem:[%s1 + $0x28] sm:$0xff]
  %v302 = vld [vmem:[%s1 + $0x30] sm:$0xff]
  %v303 = vld [vmem:[%s1 + $0x38] sm:$0xff]
  %v304 = vld [vmem:[%s1 + $0x40] sm:$0xff]
  %v305 = vld [vmem:[%s1 + $0x48] sm:$0xff]
  %v306 = vld [vmem:[%s1 + $0x50] sm:$0xff]
  %v307 = vld [vmem:[%s1 + $0x58] sm:$0xff]
  %v308 = vld [vmem:[%s1 + $0x60] sm:$0xff]
  %v309 = vld [vmem:[%s1 + $0x68] sm:$0xff]
  %v310 = vld [vmem:[%s1 + $0x70] sm:$0xff]
  %v311 = vld [vmem:[%s1 + $0x78] sm:$0xff]
  %v312 = vld [vmem:[%s1 + $0x80] sm:$0xff]
  %v313 = vld [vmem:[%s1 + $0x88] sm:$0xff]
  %v314 = vld [vmem:[%s1 + $0x90] sm:$0xff]
  %v315 = vld [vmem:[%s1 + $0x98] sm:$0xff]
  %v316 = vld [vmem:[%s1 + $0xa0] sm:$0xff]
  %v317 = vld [vmem:[%s1 + $0xa8] sm:$0xff]
  %v318 = vld [vmem:[%s1 + $0xb0] sm:$0xff]
  %v319 = vld [vmem:[%s1 + $0xb8] sm:$0xff]
  %v320 = vld [vmem:[%s1 + $0xc0] sm:$0xff]
  %v321 = vld [vmem:[%s1 + $0xc8] sm:$0xff]
  %v322 = vld [vmem:[%s1 + $0xd0] sm:$0xff]
  %v323 = vld [vmem:[%s1 + $0xd8] sm:$0xff]
  %v324 = vld [vmem:[%s1 + $0xe0] sm:$0xff]
  %v325 = vld [vmem:[%s1 + $0xe8] sm:$0xff]
  %v326 = vld [vmem:[%s1 + $0xf0] sm:$0xff]
  %v327 = vld [vmem:[%s1 + $0xf8] sm:$0xff]
  %v329 = vunpack.c.l.b16 %v295
  %v330 = vunpack.c.h.b16 %v295
  %v331 = vpack.c.b16 %v329, %v329
  %v332 = vpack.c.b16 %v330, %v330
  %v367 = vunpack.c.l.b16 %v296
  %v368 = vunpack.c.h.b16 %v296
  %v369 = vunpack.c.l.b16 %v297
  %v370 = vunpack.c.h.b16 %v297
  %v371 = vunpack.c.l.b16 %v298
  %v372 = vunpack.c.h.b16 %v298
  %v373 = vunpack.c.l.b16 %v299
  %v374 = vunpack.c.h.b16 %v299
  %v375 = vunpack.c.l.b16 %v300
  %v376 = vunpack.c.h.b16 %v300
  %v377 = vunpack.c.l.b16 %v301
  %v378 = vunpack.c.h.b16 %v301
  %v379 = vunpack.c.l.b16 %v302
  %v380 = vunpack.c.h.b16 %v302
  %v381 = vunpack.c.l.b16 %v303
  %v382 = vunpack.c.h.b16 %v303
  %v383 = vunpack.c.l.b16 %v304
  %v384 = vunpack.c.h.b16 %v304
  %v385 = vunpack.c.l.b16 %v305
  %v386 = vunpack.c.h.b16 %v305
  %v387 = vunpack.c.l.b16 %v306
  %v388 = vunpack.c.h.b16 %v306
  %v389 = vunpack.c.l.b16 %v307
  %v390 = vunpack.c.h.b16 %v307
  %v391 = vunpack.c.l.b16 %v308
  %v392 = vunpack.c.h.b16 %v308
  %v393 = vunpack.c.l.b16 %v309
  %v394 = vunpack.c.h.b16 %v309
  %v395 = vunpack.c.l.b16 %v310
  %v396 = vunpack.c.h.b16 %v310
  %v397 = vunpack.c.l.b16 %v311
  %v398 = vunpack.c.h.b16 %v311
  %v399 = vunpack.c.l.b16 %v312
  %v400 = vunpack.c.h.b16 %v312
  %v401 = vunpack.c.l.b16 %v313
  %v402 = vunpack.c.h.b16 %v313
  %v403 = vunpack.c.l.b16 %v314
  %v404 = vunpack.c.h.b16 %v314
  %v405 = vunpack.c.l.b16 %v315
  %v406 = vunpack.c.h.b16 %v315
  %v407 = vunpack.c.l.b16 %v316
  %v408 = vunpack.c.h.b16 %v316
  %v409 = vunpack.c.l.b16 %v317
  %v410 = vunpack.c.h.b16 %v317
  %v411 = vunpack.c.l.b16 %v318
  %v412 = vunpack.c.h.b16 %v318
  %v413 = vunpack.c.l.b16 %v319
  %v414 = vunpack.c.h.b16 %v319
  %v415 = vunpack.c.l.b16 %v320
  %v416 = vunpack.c.h.b16 %v320
  %v417 = vunpack.c.l.b16 %v321
  %v418 = vunpack.c.h.b16 %v321
  %v419 = vunpack.c.l.b16 %v322
  %v420 = vunpack.c.h.b16 %v322
  %v421 = vunpack.c.l.b16 %v323
  %v422 = vunpack.c.h.b16 %v323
  %v423 = vunpack.c.l.b16 %v324
  %v424 = vunpack.c.h.b16 %v324
  %v425 = vunpack.c.l.b16 %v325
  %v426 = vunpack.c.h.b16 %v325
  %v427 = vunpack.c.l.b16 %v326
  %v428 = vunpack.c.h.b16 %v326
  %v429 = vunpack.c.l.b16 %v327
  %v430 = vunpack.c.h.b16 %v327
  %v431 = vpack.c.b16 %v369, %v367
  %v432 = vpack.c.b16 %v370, %v368
  %v433 = vpack.c.b16 %v373, %v371
  %v434 = vpack.c.b16 %v374, %v372
  %v435 = vpack.c.b16 %v377, %v375
  %v436 = vpack.c.b16 %v378, %v376
  %v437 = vpack.c.b16 %v381, %v379
  %v438 = vpack.c.b16 %v382, %v380
  %v439 = vpack.c.b16 %v385, %v383
  %v440 = vpack.c.b16 %v386, %v384
  %v441 = vpack.c.b16 %v389, %v387
  %v442 = vpack.c.b16 %v390, %v388
  %v443 = vpack.c.b16 %v393, %v391
  %v444 = vpack.c.b16 %v394, %v392
  %v445 = vpack.c.b16 %v397, %v395
  %v446 = vpack.c.b16 %v398, %v396
  %v447 = vpack.c.b16 %v401, %v399
  %v448 = vpack.c.b16 %v402, %v400
  %v449 = vpack.c.b16 %v405, %v403
  %v450 = vpack.c.b16 %v406, %v404
  %v451 = vpack.c.b16 %v409, %v407
  %v452 = vpack.c.b16 %v410, %v408
  %v453 = vpack.c.b16 %v413, %v411
  %v454 = vpack.c.b16 %v414, %v412
  %v455 = vpack.c.b16 %v417, %v415
  %v456 = vpack.c.b16 %v418, %v416
  %v457 = vpack.c.b16 %v421, %v419
  %v458 = vpack.c.b16 %v422, %v420
  %v459 = vpack.c.b16 %v425, %v423
  %v460 = vpack.c.b16 %v426, %v424
  %v461 = vpack.c.b16 %v429, %v427
  %v462 = vpack.c.b16 %v430, %v428
  %495 = vmatprep.subr.bf16.mxu0 %v432
  %496 = vmatpush1.bf16.msra.mxu0 %v431
  %497 = vmatprep.subr.bf16.mxu0 %v434
  %498 = vmatpush1.bf16.msra.mxu0 %v433
  %499 = vmatprep.subr.bf16.mxu0 %v436
  %500 = vmatpush1.bf16.msra.mxu0 %v435
  %501 = vmatprep.subr.bf16.mxu0 %v438
  %502 = vmatpush1.bf16.msra.mxu0 %v437
  %503 = vmatprep.subr.bf16.mxu0 %v440
  %504 = vmatpush1.bf16.msra.mxu0 %v439
  %505 = vmatprep.subr.bf16.mxu0 %v442
  %506 = vmatpush1.bf16.msra.mxu0 %v441
  %507 = vmatprep.subr.bf16.mxu0 %v444
  %508 = vmatpush1.bf16.msra.mxu0 %v443
  %509 = vmatprep.subr.bf16.mxu0 %v446
  %510 = vmatpush1.bf16.msra.mxu0 %v445
  %511 = vmatprep.subr.bf16.mxu0 %v448
  %512 = vmatpush1.bf16.msra.mxu0 %v447
  %513 = vmatprep.subr.bf16.mxu0 %v450
  %514 = vmatpush1.bf16.msra.mxu0 %v449
  %515 = vmatprep.subr.bf16.mxu0 %v452
  %516 = vmatpush1.bf16.msra.mxu0 %v451
  %517 = vmatprep.subr.bf16.mxu0 %v454
  %518 = vmatpush1.bf16.msra.mxu0 %v453
  %519 = vmatprep.subr.bf16.mxu0 %v456
  %520 = vmatpush1.bf16.msra.mxu0 %v455
  %521 = vmatprep.subr.bf16.mxu0 %v458
  %522 = vmatpush1.bf16.msra.mxu0 %v457
  %523 = vmatprep.subr.bf16.mxu0 %v460
  %524 = vmatpush1.bf16.msra.mxu0 %v459
  %525 = vmatprep.subr.bf16.mxu0 %v462
  %526 = vmatpush1.bf16.msra.mxu0 %v461
  %527 = vmatprep.mubr.bf16.mxu0 %v332
  %528 = vmatmul.mubr.bf16.gmra.mrb[0].mxu0 %v331
  %v529 = vpop.f32.mrb[0].mxu0
  %v530 = vadd.f32 %v32, %v529
  %v531 = vpop.f32.mrb[0].mxu0
  %v532 = vadd.f32 %v36, %v531
  %v533 = vpop.f32.mrb[0].mxu0
  %v534 = vpop.f32.mrb[0].mxu0
  %535 = vdwg.mxu0
  %vm536 = vcmp.ge.f32.partialorder %v530, 0.0
  %vm537 = vcmp.ge.f32.partialorder %v532, 0.0
  %v538 = vmul.f32 %v530, 0.01
  %v539 = vmul.f32 %v532, 0.01
  %v540 = vsel %vm536, %v530, %v538
  %v541 = vsel %vm537, %v532, %v539
  %v542 = vpack.c.bf16 %v540, %v540
  %v543 = vpack.c.bf16 %v541, %v541
  %v546 = vunpack.c.l.b16 %v542
  %v547 = vunpack.c.l.b16 %v543
  %v548 = vpack.c.b16 %v547, %v546
  %550 = vst [vmem:[#allocation2 + $0x8] sm:$0xff] %v548
  %v551 = vld [vmem:[%s0 + $0x10] sm:$0xff]
  %v552 = vld [vmem:[%s1] sm:$0xff]
  %v553 = vld [vmem:[%s1 + $0x8] sm:$0xff]
  %v554 = vld [vmem:[%s1 + $0x10] sm:$0xff]
  %v555 = vld [vmem:[%s1 + $0x18] sm:$0xff]
  %v556 = vld [vmem:[%s1 + $0x20] sm:$0xff]
  %v557 = vld [vmem:[%s1 + $0x28] sm:$0xff]
  %v558 = vld [vmem:[%s1 + $0x30] sm:$0xff]
  %v559 = vld [vmem:[%s1 + $0x38] sm:$0xff]
  %v560 = vld [vmem:[%s1 + $0x40] sm:$0xff]
  %v561 = vld [vmem:[%s1 + $0x48] sm:$0xff]
  %v562 = vld [vmem:[%s1 + $0x50] sm:$0xff]
  %v563 = vld [vmem:[%s1 + $0x58] sm:$0xff]
  %v564 = vld [vmem:[%s1 + $0x60] sm:$0xff]
  %v565 = vld [vmem:[%s1 + $0x68] sm:$0xff]
  %v566 = vld [vmem:[%s1 + $0x70] sm:$0xff]
  %v567 = vld [vmem:[%s1 + $0x78] sm:$0xff]
  %v568 = vld [vmem:[%s1 + $0x80] sm:$0xff]
  %v569 = vld [vmem:[%s1 + $0x88] sm:$0xff]
  %v570 = vld [vmem:[%s1 + $0x90] sm:$0xff]
  %v571 = vld [vmem:[%s1 + $0x98] sm:$0xff]
  %v572 = vld [vmem:[%s1 + $0xa0] sm:$0xff]
  %v573 = vld [vmem:[%s1 + $0xa8] sm:$0xff]
  %v574 = vld [vmem:[%s1 + $0xb0] sm:$0xff]
  %v575 = vld [vmem:[%s1 + $0xb8] sm:$0xff]
  %v576 = vld [vmem:[%s1 + $0xc0] sm:$0xff]
  %v577 = vld [vmem:[%s1 + $0xc8] sm:$0xff]
  %v578 = vld [vmem:[%s1 + $0xd0] sm:$0xff]
  %v579 = vld [vmem:[%s1 + $0xd8] sm:$0xff]
  %v580 = vld [vmem:[%s1 + $0xe0] sm:$0xff]
  %v581 = vld [vmem:[%s1 + $0xe8] sm:$0xff]
  %v582 = vld [vmem:[%s1 + $0xf0] sm:$0xff]
  %v583 = vld [vmem:[%s1 + $0xf8] sm:$0xff]
  %v585 = vunpack.c.l.b16 %v551
  %v586 = vunpack.c.h.b16 %v551
  %v587 = vpack.c.b16 %v585, %v585
  %v588 = vpack.c.b16 %v586, %v586
  %v623 = vunpack.c.l.b16 %v552
  %v624 = vunpack.c.h.b16 %v552
  %v625 = vunpack.c.l.b16 %v553
  %v626 = vunpack.c.h.b16 %v553
  %v627 = vunpack.c.l.b16 %v554
  %v628 = vunpack.c.h.b16 %v554
  %v629 = vunpack.c.l.b16 %v555
  %v630 = vunpack.c.h.b16 %v555
  %v631 = vunpack.c.l.b16 %v556
  %v632 = vunpack.c.h.b16 %v556
  %v633 = vunpack.c.l.b16 %v557
  %v634 = vunpack.c.h.b16 %v557
  %v635 = vunpack.c.l.b16 %v558
  %v636 = vunpack.c.h.b16 %v558
  %v637 = vunpack.c.l.b16 %v559
  %v638 = vunpack.c.h.b16 %v559
  %v639 = vunpack.c.l.b16 %v560
  %v640 = vunpack.c.h.b16 %v560
  %v641 = vunpack.c.l.b16 %v561
  %v642 = vunpack.c.h.b16 %v561
  %v643 = vunpack.c.l.b16 %v562
  %v644 = vunpack.c.h.b16 %v562
  %v645 = vunpack.c.l.b16 %v563
  %v646 = vunpack.c.h.b16 %v563
  %v647 = vunpack.c.l.b16 %v564
  %v648 = vunpack.c.h.b16 %v564
  %v649 = vunpack.c.l.b16 %v565
  %v650 = vunpack.c.h.b16 %v565
  %v651 = vunpack.c.l.b16 %v566
  %v652 = vunpack.c.h.b16 %v566
  %v653 = vunpack.c.l.b16 %v567
  %v654 = vunpack.c.h.b16 %v567
  %v655 = vunpack.c.l.b16 %v568
  %v656 = vunpack.c.h.b16 %v568
  %v657 = vunpack.c.l.b16 %v569
  %v658 = vunpack.c.h.b16 %v569
  %v659 = vunpack.c.l.b16 %v570
  %v660 = vunpack.c.h.b16 %v570
  %v661 = vunpack.c.l.b16 %v571
  %v662 = vunpack.c.h.b16 %v571
  %v663 = vunpack.c.l.b16 %v572
  %v664 = vunpack.c.h.b16 %v572
  %v665 = vunpack.c.l.b16 %v573
  %v666 = vunpack.c.h.b16 %v573
  %v667 = vunpack.c.l.b16 %v574
  %v668 = vunpack.c.h.b16 %v574
  %v669 = vunpack.c.l.b16 %v575
  %v670 = vunpack.c.h.b16 %v575
  %v671 = vunpack.c.l.b16 %v576
  %v672 = vunpack.c.h.b16 %v576
  %v673 = vunpack.c.l.b16 %v577
  %v674 = vunpack.c.h.b16 %v577
  %v675 = vunpack.c.l.b16 %v578
  %v676 = vunpack.c.h.b16 %v578
  %v677 = vunpack.c.l.b16 %v579
  %v678 = vunpack.c.h.b16 %v579
  %v679 = vunpack.c.l.b16 %v580
  %v680 = vunpack.c.h.b16 %v580
  %v681 = vunpack.c.l.b16 %v581
  %v682 = vunpack.c.h.b16 %v581
  %v683 = vunpack.c.l.b16 %v582
  %v684 = vunpack.c.h.b16 %v582
  %v685 = vunpack.c.l.b16 %v583
  %v686 = vunpack.c.h.b16 %v583
  %v687 = vpack.c.b16 %v625, %v623
  %v688 = vpack.c.b16 %v626, %v624
  %v689 = vpack.c.b16 %v629, %v627
  %v690 = vpack.c.b16 %v630, %v628
  %v691 = vpack.c.b16 %v633, %v631
  %v692 = vpack.c.b16 %v634, %v632
  %v693 = vpack.c.b16 %v637, %v635
  %v694 = vpack.c.b16 %v638, %v636
  %v695 = vpack.c.b16 %v641, %v639
  %v696 = vpack.c.b16 %v642, %v640
  %v697 = vpack.c.b16 %v645, %v643
  %v698 = vpack.c.b16 %v646, %v644
  %v699 = vpack.c.b16 %v649, %v647
  %v700 = vpack.c.b16 %v650, %v648
  %v701 = vpack.c.b16 %v653, %v651
  %v702 = vpack.c.b16 %v654, %v652
  %v703 = vpack.c.b16 %v657, %v655
  %v704 = vpack.c.b16 %v658, %v656
  %v705 = vpack.c.b16 %v661, %v659
  %v706 = vpack.c.b16 %v662, %v660
  %v707 = vpack.c.b16 %v665, %v663
  %v708 = vpack.c.b16 %v666, %v664
  %v709 = vpack.c.b16 %v669, %v667
  %v710 = vpack.c.b16 %v670, %v668
  %v711 = vpack.c.b16 %v673, %v671
  %v712 = vpack.c.b16 %v674, %v672
  %v713 = vpack.c.b16 %v677, %v675
  %v714 = vpack.c.b16 %v678, %v676
  %v715 = vpack.c.b16 %v681, %v679
  %v716 = vpack.c.b16 %v682, %v680
  %v717 = vpack.c.b16 %v685, %v683
  %v718 = vpack.c.b16 %v686, %v684
  %751 = vmatprep.subr.bf16.mxu0 %v688
  %752 = vmatpush1.bf16.msra.mxu0 %v687
  %753 = vmatprep.subr.bf16.mxu0 %v690
  %754 = vmatpush1.bf16.msra.mxu0 %v689
  %755 = vmatprep.subr.bf16.mxu0 %v692
  %756 = vmatpush1.bf16.msra.mxu0 %v691
  %757 = vmatprep.subr.bf16.mxu0 %v694
  %758 = vmatpush1.bf16.msra.mxu0 %v693
  %759 = vmatprep.subr.bf16.mxu0 %v696
  %760 = vmatpush1.bf16.msra.mxu0 %v695
  %761 = vmatprep.subr.bf16.mxu0 %v698
  %762 = vmatpush1.bf16.msra.mxu0 %v697
  %763 = vmatprep.subr.bf16.mxu0 %v700
  %764 = vmatpush1.bf16.msra.mxu0 %v699
  %765 = vmatprep.subr.bf16.mxu0 %v702
  %766 = vmatpush1.bf16.msra.mxu0 %v701
  %767 = vmatprep.subr.bf16.mxu0 %v704
  %768 = vmatpush1.bf16.msra.mxu0 %v703
  %769 = vmatprep.subr.bf16.mxu0 %v706
  %770 = vmatpush1.bf16.msra.mxu0 %v705
  %771 = vmatprep.subr.bf16.mxu0 %v708
  %772 = vmatpush1.bf16.msra.mxu0 %v707
  %773 = vmatprep.subr.bf16.mxu0 %v710
  %774 = vmatpush1.bf16.msra.mxu0 %v709
  %775 = vmatprep.subr.bf16.mxu0 %v712
  %776 = vmatpush1.bf16.msra.mxu0 %v711
  %777 = vmatprep.subr.bf16.mxu0 %v714
  %778 = vmatpush1.bf16.msra.mxu0 %v713
  %779 = vmatprep.subr.bf16.mxu0 %v716
  %780 = vmatpush1.bf16.msra.mxu0 %v715
  %781 = vmatprep.subr.bf16.mxu0 %v718
  %782 = vmatpush1.bf16.msra.mxu0 %v717
  %783 = vmatprep.mubr.bf16.mxu0 %v588
  %784 = vmatmul.mubr.bf16.gmra.mrb[0].mxu0 %v587
  %v785 = vpop.f32.mrb[0].mxu0
  %v786 = vadd.f32 %v32, %v785
  %v787 = vpop.f32.mrb[0].mxu0
  %v788 = vadd.f32 %v36, %v787
  %v789 = vpop.f32.mrb[0].mxu0
  %v790 = vpop.f32.mrb[0].mxu0
  %791 = vdwg.mxu0
  %vm792 = vcmp.ge.f32.partialorder %v786, 0.0
  %vm793 = vcmp.ge.f32.partialorder %v788, 0.0
  %v794 = vmul.f32 %v786, 0.01
  %v795 = vmul.f32 %v788, 0.01
  %v796 = vsel %vm792, %v786, %v794
  %v797 = vsel %vm793, %v788, %v795
  %v798 = vpack.c.bf16 %v796, %v796
  %v799 = vpack.c.bf16 %v797, %v797
  %v802 = vunpack.c.l.b16 %v798
  %v803 = vunpack.c.l.b16 %v799
  %v804 = vpack.c.b16 %v803, %v802
  %806 = vst [vmem:[#allocation2 + $0x10] sm:$0xff] %v804
  %v807 = vld [vmem:[%s0 + $0x18] sm:$0xff]
  %v808 = vld [vmem:[%s1] sm:$0xff]
  %v809 = vld [vmem:[%s1 + $0x8] sm:$0xff]
  %v810 = vld [vmem:[%s1 + $0x10] sm:$0xff]
  %v811 = vld [vmem:[%s1 + $0x18] sm:$0xff]
  %v812 = vld [vmem:[%s1 + $0x20] sm:$0xff]
  %v813 = vld [vmem:[%s1 + $0x28] sm:$0xff]
  %v814 = vld [vmem:[%s1 + $0x30] sm:$0xff]
  %v815 = vld [vmem:[%s1 + $0x38] sm:$0xff]
  %v816 = vld [vmem:[%s1 + $0x40] sm:$0xff]
  %v817 = vld [vmem:[%s1 + $0x48] sm:$0xff]
  %v818 = vld [vmem:[%s1 + $0x50] sm:$0xff]
  %v819 = vld [vmem:[%s1 + $0x58] sm:$0xff]
  %v820 = vld [vmem:[%s1 + $0x60] sm:$0xff]
  %v821 = vld [vmem:[%s1 + $0x68] sm:$0xff]
  %v822 = vld [vmem:[%s1 + $0x70] sm:$0xff]
  %v823 = vld [vmem:[%s1 + $0x78] sm:$0xff]
  %v824 = vld [vmem:[%s1 + $0x80] sm:$0xff]
  %v825 = vld [vmem:[%s1 + $0x88] sm:$0xff]
  %v826 = vld [vmem:[%s1 + $0x90] sm:$0xff]
  %v827 = vld [vmem:[%s1 + $0x98] sm:$0xff]
  %v828 = vld [vmem:[%s1 + $0xa0] sm:$0xff]
  %v829 = vld [vmem:[%s1 + $0xa8] sm:$0xff]
  %v830 = vld [vmem:[%s1 + $0xb0] sm:$0xff]
  %v831 = vld [vmem:[%s1 + $0xb8] sm:$0xff]
  %v832 = vld [vmem:[%s1 + $0xc0] sm:$0xff]
  %v833 = vld [vmem:[%s1 + $0xc8] sm:$0xff]
  %v834 = vld [vmem:[%s1 + $0xd0] sm:$0xff]
  %v835 = vld [vmem:[%s1 + $0xd8] sm:$0xff]
  %v836 = vld [vmem:[%s1 + $0xe0] sm:$0xff]
  %v837 = vld [vmem:[%s1 + $0xe8] sm:$0xff]
  %v838 = vld [vmem:[%s1 + $0xf0] sm:$0xff]
  %v839 = vld [vmem:[%s1 + $0xf8] sm:$0xff]
  %v841 = vunpack.c.l.b16 %v807
  %v842 = vunpack.c.h.b16 %v807
  %v843 = vpack.c.b16 %v841, %v841
  %v844 = vpack.c.b16 %v842, %v842
  %v879 = vunpack.c.l.b16 %v808
  %v880 = vunpack.c.h.b16 %v808
  %v881 = vunpack.c.l.b16 %v809
  %v882 = vunpack.c.h.b16 %v809
  %v883 = vunpack.c.l.b16 %v810
  %v884 = vunpack.c.h.b16 %v810
  %v885 = vunpack.c.l.b16 %v811
  %v886 = vunpack.c.h.b16 %v811
  %v887 = vunpack.c.l.b16 %v812
  %v888 = vunpack.c.h.b16 %v812
  %v889 = vunpack.c.l.b16 %v813
  %v890 = vunpack.c.h.b16 %v813
  %v891 = vunpack.c.l.b16 %v814
  %v892 = vunpack.c.h.b16 %v814
  %v893 = vunpack.c.l.b16 %v815
  %v894 = vunpack.c.h.b16 %v815
  %v895 = vunpack.c.l.b16 %v816
  %v896 = vunpack.c.h.b16 %v816
  %v897 = vunpack.c.l.b16 %v817
  %v898 = vunpack.c.h.b16 %v817
  %v899 = vunpack.c.l.b16 %v818
  %v900 = vunpack.c.h.b16 %v818
  %v901 = vunpack.c.l.b16 %v819
  %v902 = vunpack.c.h.b16 %v819
  %v903 = vunpack.c.l.b16 %v820
  %v904 = vunpack.c.h.b16 %v820
  %v905 = vunpack.c.l.b16 %v821
  %v906 = vunpack.c.h.b16 %v821
  %v907 = vunpack.c.l.b16 %v822
  %v908 = vunpack.c.h.b16 %v822
  %v909 = vunpack.c.l.b16 %v823
  %v910 = vunpack.c.h.b16 %v823
  %v911 = vunpack.c.l.b16 %v824
  %v912 = vunpack.c.h.b16 %v824
  %v913 = vunpack.c.l.b16 %v825
  %v914 = vunpack.c.h.b16 %v825
  %v915 = vunpack.c.l.b16 %v826
  %v916 = vunpack.c.h.b16 %v826
  %v917 = vunpack.c.l.b16 %v827
  %v918 = vunpack.c.h.b16 %v827
  %v919 = vunpack.c.l.b16 %v828
  %v920 = vunpack.c.h.b16 %v828
  %v921 = vunpack.c.l.b16 %v829
  %v922 = vunpack.c.h.b16 %v829
  %v923 = vunpack.c.l.b16 %v830
  %v924 = vunpack.c.h.b16 %v830
  %v925 = vunpack.c.l.b16 %v831
  %v926 = vunpack.c.h.b16 %v831
  %v927 = vunpack.c.l.b16 %v832
  %v928 = vunpack.c.h.b16 %v832
  %v929 = vunpack.c.l.b16 %v833
  %v930 = vunpack.c.h.b16 %v833
  %v931 = vunpack.c.l.b16 %v834
  %v932 = vunpack.c.h.b16 %v834
  %v933 = vunpack.c.l.b16 %v835
  %v934 = vunpack.c.h.b16 %v835
  %v935 = vunpack.c.l.b16 %v836
  %v936 = vunpack.c.h.b16 %v836
  %v937 = vunpack.c.l.b16 %v837
  %v938 = vunpack.c.h.b16 %v837
  %v939 = vunpack.c.l.b16 %v838
  %v940 = vunpack.c.h.b16 %v838
  %v941 = vunpack.c.l.b16 %v839
  %v942 = vunpack.c.h.b16 %v839
  %v943 = vpack.c.b16 %v881, %v879
  %v944 = vpack.c.b16 %v882, %v880
  %v945 = vpack.c.b16 %v885, %v883
  %v946 = vpack.c.b16 %v886, %v884
  %v947 = vpack.c.b16 %v889, %v887
  %v948 = vpack.c.b16 %v890, %v888
  %v949 = vpack.c.b16 %v893, %v891
  %v950 = vpack.c.b16 %v894, %v892
  %v951 = vpack.c.b16 %v897, %v895
  %v952 = vpack.c.b16 %v898, %v896
  %v953 = vpack.c.b16 %v901, %v899
  %v954 = vpack.c.b16 %v902, %v900
  %v955 = vpack.c.b16 %v905, %v903
  %v956 = vpack.c.b16 %v906, %v904
  %v957 = vpack.c.b16 %v909, %v907
  %v958 = vpack.c.b16 %v910, %v908
  %v959 = vpack.c.b16 %v913, %v911
  %v960 = vpack.c.b16 %v914, %v912
  %v961 = vpack.c.b16 %v917, %v915
  %v962 = vpack.c.b16 %v918, %v916
  %v963 = vpack.c.b16 %v921, %v919
  %v964 = vpack.c.b16 %v922, %v920
  %v965 = vpack.c.b16 %v925, %v923
  %v966 = vpack.c.b16 %v926, %v924
  %v967 = vpack.c.b16 %v929, %v927
  %v968 = vpack.c.b16 %v930, %v928
  %v969 = vpack.c.b16 %v933, %v931
  %v970 = vpack.c.b16 %v934, %v932
  %v971 = vpack.c.b16 %v937, %v935
  %v972 = vpack.c.b16 %v938, %v936
  %v973 = vpack.c.b16 %v941, %v939
  %v974 = vpack.c.b16 %v942, %v940
  %1007 = vmatprep.subr.bf16.mxu0 %v944
  %1008 = vmatpush1.bf16.msra.mxu0 %v943
  %1009 = vmatprep.subr.bf16.mxu0 %v946
  %1010 = vmatpush1.bf16.msra.mxu0 %v945
  %1011 = vmatprep.subr.bf16.mxu0 %v948
  %1012 = vmatpush1.bf16.msra.mxu0 %v947
  %1013 = vmatprep.subr.bf16.mxu0 %v950
  %1014 = vmatpush1.bf16.msra.mxu0 %v949
  %1015 = vmatprep.subr.bf16.mxu0 %v952
  %1016 = vmatpush1.bf16.msra.mxu0 %v951
  %1017 = vmatprep.subr.bf16.mxu0 %v954
  %1018 = vmatpush1.bf16.msra.mxu0 %v953
  %1019 = vmatprep.subr.bf16.mxu0 %v956
  %1020 = vmatpush1.bf16.msra.mxu0 %v955
  %1021 = vmatprep.subr.bf16.mxu0 %v958
  %1022 = vmatpush1.bf16.msra.mxu0 %v957
  %1023 = vmatprep.subr.bf16.mxu0 %v960
  %1024 = vmatpush1.bf16.msra.mxu0 %v959
  %1025 = vmatprep.subr.bf16.mxu0 %v962
  %1026 = vmatpush1.bf16.msra.mxu0 %v961
  %1027 = vmatprep.subr.bf16.mxu0 %v964
  %1028 = vmatpush1.bf16.msra.mxu0 %v963
  %1029 = vmatprep.subr.bf16.mxu0 %v966
  %1030 = vmatpush1.bf16.msra.mxu0 %v965
  %1031 = vmatprep.subr.bf16.mxu0 %v968
  %1032 = vmatpush1.bf16.msra.mxu0 %v967
  %1033 = vmatprep.subr.bf16.mxu0 %v970
  %1034 = vmatpush1.bf16.msra.mxu0 %v969
  %1035 = vmatprep.subr.bf16.mxu0 %v972
  %1036 = vmatpush1.bf16.msra.mxu0 %v971
  %1037 = vmatprep.subr.bf16.mxu0 %v974
  %1038 = vmatpush1.bf16.msra.mxu0 %v973
  %1039 = vmatprep.mubr.bf16.mxu0 %v844
  %1040 = vmatmul.mubr.bf16.gmra.mrb[0].mxu0 %v843
  %v1041 = vpop.f32.mrb[0].mxu0
  %v1042 = vadd.f32 %v32, %v1041
  %v1043 = vpop.f32.mrb[0].mxu0
  %v1044 = vadd.f32 %v36, %v1043
  %v1045 = vpop.f32.mrb[0].mxu0
  %v1046 = vpop.f32.mrb[0].mxu0
  %1047 = vdwg.mxu0
  %vm1048 = vcmp.ge.f32.partialorder %v1042, 0.0
  %vm1049 = vcmp.ge.f32.partialorder %v1044, 0.0
  %v1050 = vmul.f32 %v1042, 0.01
  %v1051 = vmul.f32 %v1044, 0.01
  %v1052 = vsel %vm1048, %v1042, %v1050
  %v1053 = vsel %vm1049, %v1044, %v1051
  %v1054 = vpack.c.bf16 %v1052, %v1052
  %v1055 = vpack.c.bf16 %v1053, %v1053
  %v1058 = vunpack.c.l.b16 %v1054
  %v1059 = vunpack.c.l.b16 %v1055
  %v1060 = vpack.c.b16 %v1059, %v1058
  %1062 = vst [vmem:[#allocation2 + $0x18] sm:$0xff] %v1060
  %v1063 = vld [vmem:[#allocation2] sm:$0xff]
  %v1064 = vld [vmem:[#allocation2 + $0x8] sm:$0xff]
  %v1065 = vld [vmem:[#allocation2 + $0x10] sm:$0xff]
  %v1066 = vld [vmem:[#allocation2 + $0x18] sm:$0xff]
  %v1067 = vld [vmem:[%s3] sm:$0xff]
  %v1068 = vld [vmem:[%s3 + $0x8] sm:$0xf]
  %v1069 = vld [vmem:[%s3 + $0xc] sm:$0xff]
  %v1070 = vld [vmem:[%s3 + $0x14] sm:$0xf]
  %v1071 = vld [vmem:[%s3 + $0x18] sm:$0xff]
  %v1072 = vld [vmem:[%s3 + $0x20] sm:$0xf]
  %v1073 = vld [vmem:[%s3 + $0x24] sm:$0xff]
  %v1074 = vld [vmem:[%s3 + $0x2c] sm:$0xf]
  %v1075 = vld [vmem:[%s3 + $0x30] sm:$0xff]
  %v1076 = vld [vmem:[%s3 + $0x38] sm:$0xf]
  %v1077 = vld [vmem:[%s3 + $0x3c] sm:$0xff]
  %v1078 = vld [vmem:[%s3 + $0x44] sm:$0xf]
  %v1079 = vld [vmem:[%s3 + $0x48] sm:$0xff]
  %v1080 = vld [vmem:[%s3 + $0x50] sm:$0xf]
  %v1081 = vld [vmem:[%s3 + $0x54] sm:$0xff]
  %v1082 = vld [vmem:[%s3 + $0x5c] sm:$0xf]
  %v1083 = vld [vmem:[%s3 + $0x60] sm:$0xff]
  %v1084 = vld [vmem:[%s3 + $0x68] sm:$0xf]
  %v1085 = vld [vmem:[%s3 + $0x6c] sm:$0xff]
  %v1086 = vld [vmem:[%s3 + $0x74] sm:$0xf]
  %v1087 = vld [vmem:[%s3 + $0x78] sm:$0xff]
  %v1088 = vld [vmem:[%s3 + $0x80] sm:$0xf]
  %v1089 = vld [vmem:[%s3 + $0x84] sm:$0xff]
  %v1090 = vld [vmem:[%s3 + $0x8c] sm:$0xf]
  %v1091 = vld [vmem:[%s3 + $0x90] sm:$0xff]
  %v1092 = vld [vmem:[%s3 + $0x98] sm:$0xf]
  %v1093 = vld [vmem:[%s3 + $0x9c] sm:$0xff]
  %v1094 = vld [vmem:[%s3 + $0xa4] sm:$0xf]
  %v1095 = vld [vmem:[%s3 + $0xa8] sm:$0xff]
  %v1096 = vld [vmem:[%s3 + $0xb0] sm:$0xf]
  %v1097 = vld [vmem:[%s3 + $0xb4] sm:$0xff]
  %v1098 = vld [vmem:[%s3 + $0xbc] sm:$0xf]
  %v1099 = vld [vmem:[%s3 + $0xc0] sm:$0xff]
  %v1100 = vld [vmem:[%s3 + $0xc8] sm:$0xf]
  %v1101 = vld [vmem:[%s3 + $0xcc] sm:$0xff]
  %v1102 = vld [vmem:[%s3 + $0xd4] sm:$0xf]
  %v1103 = vld [vmem:[%s3 + $0xd8] sm:$0xff]
  %v1104 = vld [vmem:[%s3 + $0xe0] sm:$0xf]
  %v1105 = vld [vmem:[%s3 + $0xe4] sm:$0xff]
  %v1106 = vld [vmem:[%s3 + $0xec] sm:$0xf]
  %v1107 = vld [vmem:[%s3 + $0xf0] sm:$0xff]
  %v1108 = vld [vmem:[%s3 + $0xf8] sm:$0xf]
  %v1109 = vld [vmem:[%s3 + $0xfc] sm:$0xff]
  %v1110 = vld [vmem:[%s3 + $0x104] sm:$0xf]
  %v1111 = vld [vmem:[%s3 + $0x108] sm:$0xff]
  %v1112 = vld [vmem:[%s3 + $0x110] sm:$0xf]
  %v1113 = vld [vmem:[%s3 + $0x114] sm:$0xff]
  %v1114 = vld [vmem:[%s3 + $0x11c] sm:$0xf]
  %v1115 = vld [vmem:[%s3 + $0x120] sm:$0xff]
  %v1116 = vld [vmem:[%s3 + $0x128] sm:$0xf]
  %v1117 = vld [vmem:[%s3 + $0x12c] sm:$0xff]
  %v1118 = vld [vmem:[%s3 + $0x134] sm:$0xf]
  %v1119 = vld [vmem:[%s3 + $0x138] sm:$0xff]
  %v1120 = vld [vmem:[%s3 + $0x140] sm:$0xf]
  %v1121 = vld [vmem:[%s3 + $0x144] sm:$0xff]
  %v1122 = vld [vmem:[%s3 + $0x14c] sm:$0xf]
  %v1123 = vld [vmem:[%s3 + $0x150] sm:$0xff]
  %v1124 = vld [vmem:[%s3 + $0x158] sm:$0xf]
  %v1125 = vld [vmem:[%s3 + $0x15c] sm:$0xff]
  %v1126 = vld [vmem:[%s3 + $0x164] sm:$0xf]
  %v1127 = vld [vmem:[%s3 + $0x168] sm:$0xff]
  %v1128 = vld [vmem:[%s3 + $0x170] sm:$0xf]
  %v1129 = vld [vmem:[%s3 + $0x174] sm:$0xff]
  %v1130 = vld [vmem:[%s3 + $0x17c] sm:$0xf]
  %v1131 = vld [vmem:[%s3 + $0x180] sm:$0xff]
  %v1132 = vld [vmem:[%s3 + $0x188] sm:$0xf]
  %v1133 = vld [vmem:[%s3 + $0x18c] sm:$0xff]
  %v1134 = vld [vmem:[%s3 + $0x194] sm:$0xf]
  %v1135 = vld [vmem:[%s3 + $0x198] sm:$0xff]
  %v1136 = vld [vmem:[%s3 + $0x1a0] sm:$0xf]
  %v1137 = vld [vmem:[%s3 + $0x1a4] sm:$0xff]
  %v1138 = vld [vmem:[%s3 + $0x1ac] sm:$0xf]
  %v1139 = vld [vmem:[%s3 + $0x1b0] sm:$0xff]
  %v1140 = vld [vmem:[%s3 + $0x1b8] sm:$0xf]
  %v1141 = vld [vmem:[%s3 + $0x1bc] sm:$0xff]
  %v1142 = vld [vmem:[%s3 + $0x1c4] sm:$0xf]
  %v1143 = vld [vmem:[%s3 + $0x1c8] sm:$0xff]
  %v1144 = vld [vmem:[%s3 + $0x1d0] sm:$0xf]
  %v1145 = vld [vmem:[%s3 + $0x1d4] sm:$0xff]
  %v1146 = vld [vmem:[%s3 + $0x1dc] sm:$0xf]
  %v1147 = vld [vmem:[%s3 + $0x1e0] sm:$0xff]
  %v1148 = vld [vmem:[%s3 + $0x1e8] sm:$0xf]
  %v1149 = vld [vmem:[%s3 + $0x1ec] sm:$0xff]
  %v1150 = vld [vmem:[%s3 + $0x1f4] sm:$0xf]
  %v1151 = vld [vmem:[%s3 + $0x1f8] sm:$0xff]
  %v1152 = vld [vmem:[%s3 + $0x200] sm:$0xf]
  %v1153 = vld [vmem:[%s3 + $0x204] sm:$0xff]
  %v1154 = vld [vmem:[%s3 + $0x20c] sm:$0xf]
  %v1155 = vld [vmem:[%s3 + $0x210] sm:$0xff]
  %v1156 = vld [vmem:[%s3 + $0x218] sm:$0xf]
  %v1157 = vld [vmem:[%s3 + $0x21c] sm:$0xff]
  %v1158 = vld [vmem:[%s3 + $0x224] sm:$0xf]
  %v1159 = vld [vmem:[%s3 + $0x228] sm:$0xff]
  %v1160 = vld [vmem:[%s3 + $0x230] sm:$0xf]
  %v1161 = vld [vmem:[%s3 + $0x234] sm:$0xff]
  %v1162 = vld [vmem:[%s3 + $0x23c] sm:$0xf]
  %v1163 = vld [vmem:[%s3 + $0x240] sm:$0xff]
  %v1164 = vld [vmem:[%s3 + $0x248] sm:$0xf]
  %v1165 = vld [vmem:[%s3 + $0x24c] sm:$0xff]
  %v1166 = vld [vmem:[%s3 + $0x254] sm:$0xf]
  %v1167 = vld [vmem:[%s3 + $0x258] sm:$0xff]
  %v1168 = vld [vmem:[%s3 + $0x260] sm:$0xf]
  %v1169 = vld [vmem:[%s3 + $0x264] sm:$0xff]
  %v1170 = vld [vmem:[%s3 + $0x26c] sm:$0xf]
  %v1171 = vld [vmem:[%s3 + $0x270] sm:$0xff]
  %v1172 = vld [vmem:[%s3 + $0x278] sm:$0xf]
  %v1173 = vld [vmem:[%s3 + $0x27c] sm:$0xff]
  %v1174 = vld [vmem:[%s3 + $0x284] sm:$0xf]
  %v1175 = vld [vmem:[%s3 + $0x288] sm:$0xff]
  %v1176 = vld [vmem:[%s3 + $0x290] sm:$0xf]
  %v1177 = vld [vmem:[%s3 + $0x294] sm:$0xff]
  %v1178 = vld [vmem:[%s3 + $0x29c] sm:$0xf]
  %v1179 = vld [vmem:[%s3 + $0x2a0] sm:$0xff]
  %v1180 = vld [vmem:[%s3 + $0x2a8] sm:$0xf]
  %v1181 = vld [vmem:[%s3 + $0x2ac] sm:$0xff]
  %v1182 = vld [vmem:[%s3 + $0x2b4] sm:$0xf]
  %v1183 = vld [vmem:[%s3 + $0x2b8] sm:$0xff]
  %v1184 = vld [vmem:[%s3 + $0x2c0] sm:$0xf]
  %v1185 = vld [vmem:[%s3 + $0x2c4] sm:$0xff]
  %v1186 = vld [vmem:[%s3 + $0x2cc] sm:$0xf]
  %v1187 = vld [vmem:[%s3 + $0x2d0] sm:$0xff]
  %v1188 = vld [vmem:[%s3 + $0x2d8] sm:$0xf]
  %v1189 = vld [vmem:[%s3 + $0x2dc] sm:$0xff]
  %v1190 = vld [vmem:[%s3 + $0x2e4] sm:$0xf]
  %v1191 = vld [vmem:[%s3 + $0x2e8] sm:$0xff]
  %v1192 = vld [vmem:[%s3 + $0x2f0] sm:$0xf]
  %v1193 = vld [vmem:[%s3 + $0x2f4] sm:$0xff]
  %v1194 = vld [vmem:[%s3 + $0x2fc] sm:$0xf]
  %v1195 = vld [vmem:[%s3 + $0x300] sm:$0xff]
  %v1196 = vld [vmem:[%s3 + $0x308] sm:$0xf]
  %v1197 = vld [vmem:[%s3 + $0x30c] sm:$0xff]
  %v1198 = vld [vmem:[%s3 + $0x314] sm:$0xf]
  %v1199 = vld [vmem:[%s3 + $0x318] sm:$0xff]
  %v1200 = vld [vmem:[%s3 + $0x320] sm:$0xf]
  %v1201 = vld [vmem:[%s3 + $0x324] sm:$0xff]
  %v1202 = vld [vmem:[%s3 + $0x32c] sm:$0xf]
  %v1203 = vld [vmem:[%s3 + $0x330] sm:$0xff]
  %v1204 = vld [vmem:[%s3 + $0x338] sm:$0xf]
  %v1205 = vld [vmem:[%s3 + $0x33c] sm:$0xff]
  %v1206 = vld [vmem:[%s3 + $0x344] sm:$0xf]
  %v1207 = vld [vmem:[%s3 + $0x348] sm:$0xff]
  %v1208 = vld [vmem:[%s3 + $0x350] sm:$0xf]
  %v1209 = vld [vmem:[%s3 + $0x354] sm:$0xff]
  %v1210 = vld [vmem:[%s3 + $0x35c] sm:$0xf]
  %v1211 = vld [vmem:[%s3 + $0x360] sm:$0xff]
  %v1212 = vld [vmem:[%s3 + $0x368] sm:$0xf]
  %v1213 = vld [vmem:[%s3 + $0x36c] sm:$0xff]
  %v1214 = vld [vmem:[%s3 + $0x374] sm:$0xf]
  %v1215 = vld [vmem:[%s3 + $0x378] sm:$0xff]
  %v1216 = vld [vmem:[%s3 + $0x380] sm:$0xf]
  %v1217 = vld [vmem:[%s3 + $0x384] sm:$0xff]
  %v1218 = vld [vmem:[%s3 + $0x38c] sm:$0xf]
  %v1219 = vld [vmem:[%s3 + $0x390] sm:$0xff]
  %v1220 = vld [vmem:[%s3 + $0x398] sm:$0xf]
  %v1221 = vld [vmem:[%s3 + $0x39c] sm:$0xff]
  %v1222 = vld [vmem:[%s3 + $0x3a4] sm:$0xf]
  %v1223 = vld [vmem:[%s3 + $0x3a8] sm:$0xff]
  %v1224 = vld [vmem:[%s3 + $0x3b0] sm:$0xf]
  %v1225 = vld [vmem:[%s3 + $0x3b4] sm:$0xff]
  %v1226 = vld [vmem:[%s3 + $0x3bc] sm:$0xf]
  %v1227 = vld [vmem:[%s3 + $0x3c0] sm:$0xff]
  %v1228 = vld [vmem:[%s3 + $0x3c8] sm:$0xf]
  %v1229 = vld [vmem:[%s3 + $0x3cc] sm:$0xff]
  %v1230 = vld [vmem:[%s3 + $0x3d4] sm:$0xf]
  %v1231 = vld [vmem:[%s3 + $0x3d8] sm:$0xff]
  %v1232 = vld [vmem:[%s3 + $0x3e0] sm:$0xf]
  %v1233 = vld [vmem:[%s3 + $0x3e4] sm:$0xff]
  %v1234 = vld [vmem:[%s3 + $0x3ec] sm:$0xf]
  %v1235 = vld [vmem:[%s3 + $0x3f0] sm:$0xff]
  %v1236 = vld [vmem:[%s3 + $0x3f8] sm:$0xf]
  %v1237 = vld [vmem:[%s3 + $0x3fc] sm:$0xff]
  %v1238 = vld [vmem:[%s3 + $0x404] sm:$0xf]
  %v1239 = vld [vmem:[%s3 + $0x408] sm:$0xff]
  %v1240 = vld [vmem:[%s3 + $0x410] sm:$0xf]
  %v1241 = vld [vmem:[%s3 + $0x414] sm:$0xff]
  %v1242 = vld [vmem:[%s3 + $0x41c] sm:$0xf]
  %v1243 = vld [vmem:[%s3 + $0x420] sm:$0xff]
  %v1244 = vld [vmem:[%s3 + $0x428] sm:$0xf]
  %v1245 = vld [vmem:[%s3 + $0x42c] sm:$0xff]
  %v1246 = vld [vmem:[%s3 + $0x434] sm:$0xf]
  %v1247 = vld [vmem:[%s3 + $0x438] sm:$0xff]
  %v1248 = vld [vmem:[%s3 + $0x440] sm:$0xf]
  %v1249 = vld [vmem:[%s3 + $0x444] sm:$0xff]
  %v1250 = vld [vmem:[%s3 + $0x44c] sm:$0xf]
  %v1251 = vld [vmem:[%s3 + $0x450] sm:$0xff]
  %v1252 = vld [vmem:[%s3 + $0x458] sm:$0xf]
  %v1253 = vld [vmem:[%s3 + $0x45c] sm:$0xff]
  %v1254 = vld [vmem:[%s3 + $0x464] sm:$0xf]
  %v1255 = vld [vmem:[%s3 + $0x468] sm:$0xff]
  %v1256 = vld [vmem:[%s3 + $0x470] sm:$0xf]
  %v1257 = vld [vmem:[%s3 + $0x474] sm:$0xff]
  %v1258 = vld [vmem:[%s3 + $0x47c] sm:$0xf]
  %v1259 = vld [vmem:[%s3 + $0x480] sm:$0xff]
  %v1260 = vld [vmem:[%s3 + $0x488] sm:$0xf]
  %v1261 = vld [vmem:[%s3 + $0x48c] sm:$0xff]
  %v1262 = vld [vmem:[%s3 + $0x494] sm:$0xf]
  %v1263 = vld [vmem:[%s3 + $0x498] sm:$0xff]
  %v1264 = vld [vmem:[%s3 + $0x4a0] sm:$0xf]
  %v1265 = vld [vmem:[%s3 + $0x4a4] sm:$0xff]
  %v1266 = vld [vmem:[%s3 + $0x4ac] sm:$0xf]
  %v1267 = vld [vmem:[%s3 + $0x4b0] sm:$0xff]
  %v1268 = vld [vmem:[%s3 + $0x4b8] sm:$0xf]
  %v1269 = vld [vmem:[%s3 + $0x4bc] sm:$0xff]
  %v1270 = vld [vmem:[%s3 + $0x4c4] sm:$0xf]
  %v1271 = vld [vmem:[%s3 + $0x4c8] sm:$0xff]
  %v1272 = vld [vmem:[%s3 + $0x4d0] sm:$0xf]
  %v1273 = vld [vmem:[%s3 + $0x4d4] sm:$0xff]
  %v1274 = vld [vmem:[%s3 + $0x4dc] sm:$0xf]
  %v1275 = vld [vmem:[%s3 + $0x4e0] sm:$0xff]
  %v1276 = vld [vmem:[%s3 + $0x4e8] sm:$0xf]
  %v1277 = vld [vmem:[%s3 + $0x4ec] sm:$0xff]
  %v1278 = vld [vmem:[%s3 + $0x4f4] sm:$0xf]
  %v1279 = vld [vmem:[%s3 + $0x4f8] sm:$0xff]
  %v1280 = vld [vmem:[%s3 + $0x500] sm:$0xf]
  %v1281 = vld [vmem:[%s3 + $0x504] sm:$0xff]
  %v1282 = vld [vmem:[%s3 + $0x50c] sm:$0xf]
  %v1283 = vld [vmem:[%s3 + $0x510] sm:$0xff]
  %v1284 = vld [vmem:[%s3 + $0x518] sm:$0xf]
  %v1285 = vld [vmem:[%s3 + $0x51c] sm:$0xff]
  %v1286 = vld [vmem:[%s3 + $0x524] sm:$0xf]
  %v1287 = vld [vmem:[%s3 + $0x528] sm:$0xff]
  %v1288 = vld [vmem:[%s3 + $0x530] sm:$0xf]
  %v1289 = vld [vmem:[%s3 + $0x534] sm:$0xff]
  %v1290 = vld [vmem:[%s3 + $0x53c] sm:$0xf]
  %v1291 = vld [vmem:[%s3 + $0x540] sm:$0xff]
  %v1292 = vld [vmem:[%s3 + $0x548] sm:$0xf]
  %v1293 = vld [vmem:[%s3 + $0x54c] sm:$0xff]
  %v1294 = vld [vmem:[%s3 + $0x554] sm:$0xf]
  %v1295 = vld [vmem:[%s3 + $0x558] sm:$0xff]
  %v1296 = vld [vmem:[%s3 + $0x560] sm:$0xf]
  %v1297 = vld [vmem:[%s3 + $0x564] sm:$0xff]
  %v1298 = vld [vmem:[%s3 + $0x56c] sm:$0xf]
  %v1299 = vld [vmem:[%s3 + $0x570] sm:$0xff]
  %v1300 = vld [vmem:[%s3 + $0x578] sm:$0xf]
  %v1301 = vld [vmem:[%s3 + $0x57c] sm:$0xff]
  %v1302 = vld [vmem:[%s3 + $0x584] sm:$0xf]
  %v1303 = vld [vmem:[%s3 + $0x588] sm:$0xff]
  %v1304 = vld [vmem:[%s3 + $0x590] sm:$0xf]
  %v1305 = vld [vmem:[%s3 + $0x594] sm:$0xff]
  %v1306 = vld [vmem:[%s3 + $0x59c] sm:$0xf]
  %v1307 = vld [vmem:[%s3 + $0x5a0] sm:$0xff]
  %v1308 = vld [vmem:[%s3 + $0x5a8] sm:$0xf]
  %v1309 = vld [vmem:[%s3 + $0x5ac] sm:$0xff]
  %v1310 = vld [vmem:[%s3 + $0x5b4] sm:$0xf]
  %v1311 = vld [vmem:[%s3 + $0x5b8] sm:$0xff]
  %v1312 = vld [vmem:[%s3 + $0x5c0] sm:$0xf]
  %v1313 = vld [vmem:[%s3 + $0x5c4] sm:$0xff]
  %v1314 = vld [vmem:[%s3 + $0x5cc] sm:$0xf]
  %v1315 = vld [vmem:[%s3 + $0x5d0] sm:$0xff]
  %v1316 = vld [vmem:[%s3 + $0x5d8] sm:$0xf]
  %v1317 = vld [vmem:[%s3 + $0x5dc] sm:$0xff]
  %v1318 = vld [vmem:[%s3 + $0x5e4] sm:$0xf]
  %v1319 = vld [vmem:[%s3 + $0x5e8] sm:$0xff]
  %v1320 = vld [vmem:[%s3 + $0x5f0] sm:$0xf]
  %v1321 = vld [vmem:[%s3 + $0x5f4] sm:$0xff]
  %v1322 = vld [vmem:[%s3 + $0x5fc] sm:$0xf]
  %v1323 = vld [vmem:[%s4] sm:$0x7]
  %v1325 = vlaneseq
  %v1326 = vshrl.u32 %v1325, 7
  %v1327 = vsub.s32 0, %v1326
  %v1328 = vrot.slane %v1323, %v1327
  %v1329 = vlaneseq
  %v1330 = vshrl.u32 %v1329, 7
  %v1331 = vsub.s32 1, %v1330
  %v1332 = vrot.slane %v1323, %v1331
  %v1333 = vlaneseq
  %v1334 = vshrl.u32 %v1333, 7
  %v1335 = vsub.s32 2, %v1334
  %v1336 = vrot.slane %v1323, %v1335
  %v1344 = vunpack.c.l.b16 %v1063
  %v1345 = vunpack.c.h.b16 %v1063
  %v1346 = vunpack.c.l.b16 %v1064
  %v1347 = vunpack.c.h.b16 %v1064
  %v1348 = vunpack.c.l.b16 %v1065
  %v1349 = vunpack.c.h.b16 %v1065
  %v1350 = vunpack.c.l.b16 %v1066
  %v1351 = vunpack.c.h.b16 %v1066
  %v1352 = vpack.c.b16 %v1344, %v1344
  %v1353 = vpack.c.b16 %v1345, %v1345
  %v1354 = vpack.c.b16 %v1346, %v1346
  %v1355 = vpack.c.b16 %v1347, %v1347
  %v1356 = vpack.c.b16 %v1348, %v1348
  %v1357 = vpack.c.b16 %v1349, %v1349
  %v1358 = vpack.c.b16 %v1350, %v1350
  %v1359 = vpack.c.b16 %v1351, %v1351
  %v1624 = vunpack.c.l.b16 %v1067
  %v1625 = vunpack.c.h.b16 %v1067
  %v1626 = vunpack.c.l.b16 %v1068
  %v1627 = vunpack.c.l.b16 %v1069
  %v1628 = vunpack.c.h.b16 %v1069
  %v1629 = vunpack.c.l.b16 %v1070
  %v1630 = vunpack.c.l.b16 %v1071
  %v1631 = vunpack.c.h.b16 %v1071
  %v1632 = vunpack.c.l.b16 %v1072
  %v1633 = vunpack.c.l.b16 %v1073
  %v1634 = vunpack.c.h.b16 %v1073
  %v1635 = vunpack.c.l.b16 %v1074
  %v1636 = vunpack.c.l.b16 %v1075
  %v1637 = vunpack.c.h.b16 %v1075
  %v1638 = vunpack.c.l.b16 %v1076
  %v1639 = vunpack.c.l.b16 %v1077
  %v1640 = vunpack.c.h.b16 %v1077
  %v1641 = vunpack.c.l.b16 %v1078
  %v1642 = vunpack.c.l.b16 %v1079
  %v1643 = vunpack.c.h.b16 %v1079
  %v1644 = vunpack.c.l.b16 %v1080
  %v1645 = vunpack.c.l.b16 %v1081
  %v1646 = vunpack.c.h.b16 %v1081
  %v1647 = vunpack.c.l.b16 %v1082
  %v1648 = vunpack.c.l.b16 %v1083
  %v1649 = vunpack.c.h.b16 %v1083
  %v1650 = vunpack.c.l.b16 %v1084
  %v1651 = vunpack.c.l.b16 %v1085
  %v1652 = vunpack.c.h.b16 %v1085
  %v1653 = vunpack.c.l.b16 %v1086
  %v1654 = vunpack.c.l.b16 %v1087
  %v1655 = vunpack.c.h.b16 %v1087
  %v1656 = vunpack.c.l.b16 %v1088
  %v1657 = vunpack.c.l.b16 %v1089
  %v1658 = vunpack.c.h.b16 %v1089
  %v1659 = vunpack.c.l.b16 %v1090
  %v1660 = vunpack.c.l.b16 %v1091
  %v1661 = vunpack.c.h.b16 %v1091
  %v1662 = vunpack.c.l.b16 %v1092
  %v1663 = vunpack.c.l.b16 %v1093
  %v1664 = vunpack.c.h.b16 %v1093
  %v1665 = vunpack.c.l.b16 %v1094
  %v1666 = vunpack.c.l.b16 %v1095
  %v1667 = vunpack.c.h.b16 %v1095
  %v1668 = vunpack.c.l.b16 %v1096
  %v1669 = vunpack.c.l.b16 %v1097
  %v1670 = vunpack.c.h.b16 %v1097
  %v1671 = vunpack.c.l.b16 %v1098
  %v1672 = vunpack.c.l.b16 %v1099
  %v1673 = vunpack.c.h.b16 %v1099
  %v1674 = vunpack.c.l.b16 %v1100
  %v1675 = vunpack.c.l.b16 %v1101
  %v1676 = vunpack.c.h.b16 %v1101
  %v1677 = vunpack.c.l.b16 %v1102
  %v1678 = vunpack.c.l.b16 %v1103
  %v1679 = vunpack.c.h.b16 %v1103
  %v1680 = vunpack.c.l.b16 %v1104
  %v1681 = vunpack.c.l.b16 %v1105
  %v1682 = vunpack.c.h.b16 %v1105
  %v1683 = vunpack.c.l.b16 %v1106
  %v1684 = vunpack.c.l.b16 %v1107
  %v1685 = vunpack.c.h.b16 %v1107
  %v1686 = vunpack.c.l.b16 %v1108
  %v1687 = vunpack.c.l.b16 %v1109
  %v1688 = vunpack.c.h.b16 %v1109
  %v1689 = vunpack.c.l.b16 %v1110
  %v1690 = vunpack.c.l.b16 %v1111
  %v1691 = vunpack.c.h.b16 %v1111
  %v1692 = vunpack.c.l.b16 %v1112
  %v1693 = vunpack.c.l.b16 %v1113
  %v1694 = vunpack.c.h.b16 %v1113
  %v1695 = vunpack.c.l.b16 %v1114
  %v1696 = vunpack.c.l.b16 %v1115
  %v1697 = vunpack.c.h.b16 %v1115
  %v1698 = vunpack.c.l.b16 %v1116
  %v1699 = vunpack.c.l.b16 %v1117
  %v1700 = vunpack.c.h.b16 %v1117
  %v1701 = vunpack.c.l.b16 %v1118
  %v1702 = vunpack.c.l.b16 %v1119
  %v1703 = vunpack.c.h.b16 %v1119
  %v1704 = vunpack.c.l.b16 %v1120
  %v1705 = vunpack.c.l.b16 %v1121
  %v1706 = vunpack.c.h.b16 %v1121
  %v1707 = vunpack.c.l.b16 %v1122
  %v1708 = vunpack.c.l.b16 %v1123
  %v1709 = vunpack.c.h.b16 %v1123
  %v1710 = vunpack.c.l.b16 %v1124
  %v1711 = vunpack.c.l.b16 %v1125
  %v1712 = vunpack.c.h.b16 %v1125
  %v1713 = vunpack.c.l.b16 %v1126
  %v1714 = vunpack.c.l.b16 %v1127
  %v1715 = vunpack.c.h.b16 %v1127
  %v1716 = vunpack.c.l.b16 %v1128
  %v1717 = vunpack.c.l.b16 %v1129
  %v1718 = vunpack.c.h.b16 %v1129
  %v1719 = vunpack.c.l.b16 %v1130
  %v1720 = vunpack.c.l.b16 %v1131
  %v1721 = vunpack.c.h.b16 %v1131
  %v1722 = vunpack.c.l.b16 %v1132
  %v1723 = vunpack.c.l.b16 %v1133
  %v1724 = vunpack.c.h.b16 %v1133
  %v1725 = vunpack.c.l.b16 %v1134
  %v1726 = vunpack.c.l.b16 %v1135
  %v1727 = vunpack.c.h.b16 %v1135
  %v1728 = vunpack.c.l.b16 %v1136
  %v1729 = vunpack.c.l.b16 %v1137
  %v1730 = vunpack.c.h.b16 %v1137
  %v1731 = vunpack.c.l.b16 %v1138
  %v1732 = vunpack.c.l.b16 %v1139
  %v1733 = vunpack.c.h.b16 %v1139
  %v1734 = vunpack.c.l.b16 %v1140
  %v1735 = vunpack.c.l.b16 %v1141
  %v1736 = vunpack.c.h.b16 %v1141
  %v1737 = vunpack.c.l.b16 %v1142
  %v1738 = vunpack.c.l.b16 %v1143
  %v1739 = vunpack.c.h.b16 %v1143
  %v1740 = vunpack.c.l.b16 %v1144
  %v1741 = vunpack.c.l.b16 %v1145
  %v1742 = vunpack.c.h.b16 %v1145
  %v1743 = vunpack.c.l.b16 %v1146
  %v1744 = vunpack.c.l.b16 %v1147
  %v1745 = vunpack.c.h.b16 %v1147
  %v1746 = vunpack.c.l.b16 %v1148
  %v1747 = vunpack.c.l.b16 %v1149
  %v1748 = vunpack.c.h.b16 %v1149
  %v1749 = vunpack.c.l.b16 %v1150
  %v1750 = vunpack.c.l.b16 %v1151
  %v1751 = vunpack.c.h.b16 %v1151
  %v1752 = vunpack.c.l.b16 %v1152
  %v1753 = vunpack.c.l.b16 %v1153
  %v1754 = vunpack.c.h.b16 %v1153
  %v1755 = vunpack.c.l.b16 %v1154
  %v1756 = vunpack.c.l.b16 %v1155
  %v1757 = vunpack.c.h.b16 %v1155
  %v1758 = vunpack.c.l.b16 %v1156
  %v1759 = vunpack.c.l.b16 %v1157
  %v1760 = vunpack.c.h.b16 %v1157
  %v1761 = vunpack.c.l.b16 %v1158
  %v1762 = vunpack.c.l.b16 %v1159
  %v1763 = vunpack.c.h.b16 %v1159
  %v1764 = vunpack.c.l.b16 %v1160
  %v1765 = vunpack.c.l.b16 %v1161
  %v1766 = vunpack.c.h.b16 %v1161
  %v1767 = vunpack.c.l.b16 %v1162
  %v1768 = vunpack.c.l.b16 %v1163
  %v1769 = vunpack.c.h.b16 %v1163
  %v1770 = vunpack.c.l.b16 %v1164
  %v1771 = vunpack.c.l.b16 %v1165
  %v1772 = vunpack.c.h.b16 %v1165
  %v1773 = vunpack.c.l.b16 %v1166
  %v1774 = vunpack.c.l.b16 %v1167
  %v1775 = vunpack.c.h.b16 %v1167
  %v1776 = vunpack.c.l.b16 %v1168
  %v1777 = vunpack.c.l.b16 %v1169
  %v1778 = vunpack.c.h.b16 %v1169
  %v1779 = vunpack.c.l.b16 %v1170
  %v1780 = vunpack.c.l.b16 %v1171
  %v1781 = vunpack.c.h.b16 %v1171
  %v1782 = vunpack.c.l.b16 %v1172
  %v1783 = vunpack.c.l.b16 %v1173
  %v1784 = vunpack.c.h.b16 %v1173
  %v1785 = vunpack.c.l.b16 %v1174
  %v1786 = vunpack.c.l.b16 %v1175
  %v1787 = vunpack.c.h.b16 %v1175
  %v1788 = vunpack.c.l.b16 %v1176
  %v1789 = vunpack.c.l.b16 %v1177
  %v1790 = vunpack.c.h.b16 %v1177
  %v1791 = vunpack.c.l.b16 %v1178
  %v1792 = vunpack.c.l.b16 %v1179
  %v1793 = vunpack.c.h.b16 %v1179
  %v1794 = vunpack.c.l.b16 %v1180
  %v1795 = vunpack.c.l.b16 %v1181
  %v1796 = vunpack.c.h.b16 %v1181
  %v1797 = vunpack.c.l.b16 %v1182
  %v1798 = vunpack.c.l.b16 %v1183
  %v1799 = vunpack.c.h.b16 %v1183
  %v1800 = vunpack.c.l.b16 %v1184
  %v1801 = vunpack.c.l.b16 %v1185
  %v1802 = vunpack.c.h.b16 %v1185
  %v1803 = vunpack.c.l.b16 %v1186
  %v1804 = vunpack.c.l.b16 %v1187
  %v1805 = vunpack.c.h.b16 %v1187
  %v1806 = vunpack.c.l.b16 %v1188
  %v1807 = vunpack.c.l.b16 %v1189
  %v1808 = vunpack.c.h.b16 %v1189
  %v1809 = vunpack.c.l.b16 %v1190
  %v1810 = vunpack.c.l.b16 %v1191
  %v1811 = vunpack.c.h.b16 %v1191
  %v1812 = vunpack.c.l.b16 %v1192
  %v1813 = vunpack.c.l.b16 %v1193
  %v1814 = vunpack.c.h.b16 %v1193
  %v1815 = vunpack.c.l.b16 %v1194
  %v1816 = vunpack.c.l.b16 %v1195
  %v1817 = vunpack.c.h.b16 %v1195
  %v1818 = vunpack.c.l.b16 %v1196
  %v1819 = vunpack.c.l.b16 %v1197
  %v1820 = vunpack.c.h.b16 %v1197
  %v1821 = vunpack.c.l.b16 %v1198
  %v1822 = vunpack.c.l.b16 %v1199
  %v1823 = vunpack.c.h.b16 %v1199
  %v1824 = vunpack.c.l.b16 %v1200
  %v1825 = vunpack.c.l.b16 %v1201
  %v1826 = vunpack.c.h.b16 %v1201
  %v1827 = vunpack.c.l.b16 %v1202
  %v1828 = vunpack.c.l.b16 %v1203
  %v1829 = vunpack.c.h.b16 %v1203
  %v1830 = vunpack.c.l.b16 %v1204
  %v1831 = vunpack.c.l.b16 %v1205
  %v1832 = vunpack.c.h.b16 %v1205
  %v1833 = vunpack.c.l.b16 %v1206
  %v1834 = vunpack.c.l.b16 %v1207
  %v1835 = vunpack.c.h.b16 %v1207
  %v1836 = vunpack.c.l.b16 %v1208
  %v1837 = vunpack.c.l.b16 %v1209
  %v1838 = vunpack.c.h.b16 %v1209
  %v1839 = vunpack.c.l.b16 %v1210
  %v1840 = vunpack.c.l.b16 %v1211
  %v1841 = vunpack.c.h.b16 %v1211
  %v1842 = vunpack.c.l.b16 %v1212
  %v1843 = vunpack.c.l.b16 %v1213
  %v1844 = vunpack.c.h.b16 %v1213
  %v1845 = vunpack.c.l.b16 %v1214
  %v1846 = vunpack.c.l.b16 %v1215
  %v1847 = vunpack.c.h.b16 %v1215
  %v1848 = vunpack.c.l.b16 %v1216
  %v1849 = vunpack.c.l.b16 %v1217
  %v1850 = vunpack.c.h.b16 %v1217
  %v1851 = vunpack.c.l.b16 %v1218
  %v1852 = vunpack.c.l.b16 %v1219
  %v1853 = vunpack.c.h.b16 %v1219
  %v1854 = vunpack.c.l.b16 %v1220
  %v1855 = vunpack.c.l.b16 %v1221
  %v1856 = vunpack.c.h.b16 %v1221
  %v1857 = vunpack.c.l.b16 %v1222
  %v1858 = vunpack.c.l.b16 %v1223
  %v1859 = vunpack.c.h.b16 %v1223
  %v1860 = vunpack.c.l.b16 %v1224
  %v1861 = vunpack.c.l.b16 %v1225
  %v1862 = vunpack.c.h.b16 %v1225
  %v1863 = vunpack.c.l.b16 %v1226
  %v1864 = vunpack.c.l.b16 %v1227
  %v1865 = vunpack.c.h.b16 %v1227
  %v1866 = vunpack.c.l.b16 %v1228
  %v1867 = vunpack.c.l.b16 %v1229
  %v1868 = vunpack.c.h.b16 %v1229
  %v1869 = vunpack.c.l.b16 %v1230
  %v1870 = vunpack.c.l.b16 %v1231
  %v1871 = vunpack.c.h.b16 %v1231
  %v1872 = vunpack.c.l.b16 %v1232
  %v1873 = vunpack.c.l.b16 %v1233
  %v1874 = vunpack.c.h.b16 %v1233
  %v1875 = vunpack.c.l.b16 %v1234
  %v1876 = vunpack.c.l.b16 %v1235
  %v1877 = vunpack.c.h.b16 %v1235
  %v1878 = vunpack.c.l.b16 %v1236
  %v1879 = vunpack.c.l.b16 %v1237
  %v1880 = vunpack.c.h.b16 %v1237
  %v1881 = vunpack.c.l.b16 %v1238
  %v1882 = vunpack.c.l.b16 %v1239
  %v1883 = vunpack.c.h.b16 %v1239
  %v1884 = vunpack.c.l.b16 %v1240
  %v1885 = vunpack.c.l.b16 %v1241
  %v1886 = vunpack.c.h.b16 %v1241
  %v1887 = vunpack.c.l.b16 %v1242
  %v1888 = vunpack.c.l.b16 %v1243
  %v1889 = vunpack.c.h.b16 %v1243
  %v1890 = vunpack.c.l.b16 %v1244
  %v1891 = vunpack.c.l.b16 %v1245
  %v1892 = vunpack.c.h.b16 %v1245
  %v1893 = vunpack.c.l.b16 %v1246
  %v1894 = vunpack.c.l.b16 %v1247
  %v1895 = vunpack.c.h.b16 %v1247
  %v1896 = vunpack.c.l.b16 %v1248
  %v1897 = vunpack.c.l.b16 %v1249
  %v1898 = vunpack.c.h.b16 %v1249
  %v1899 = vunpack.c.l.b16 %v1250
  %v1900 = vunpack.c.l.b16 %v1251
  %v1901 = vunpack.c.h.b16 %v1251
  %v1902 = vunpack.c.l.b16 %v1252
  %v1903 = vunpack.c.l.b16 %v1253
  %v1904 = vunpack.c.h.b16 %v1253
  %v1905 = vunpack.c.l.b16 %v1254
  %v1906 = vunpack.c.l.b16 %v1255
  %v1907 = vunpack.c.h.b16 %v1255
  %v1908 = vunpack.c.l.b16 %v1256
  %v1909 = vunpack.c.l.b16 %v1257
  %v1910 = vunpack.c.h.b16 %v1257
  %v1911 = vunpack.c.l.b16 %v1258
  %v1912 = vunpack.c.l.b16 %v1259
  %v1913 = vunpack.c.h.b16 %v1259
  %v1914 = vunpack.c.l.b16 %v1260
  %v1915 = vunpack.c.l.b16 %v1261
  %v1916 = vunpack.c.h.b16 %v1261
  %v1917 = vunpack.c.l.b16 %v1262
  %v1918 = vunpack.c.l.b16 %v1263
  %v1919 = vunpack.c.h.b16 %v1263
  %v1920 = vunpack.c.l.b16 %v1264
  %v1921 = vunpack.c.l.b16 %v1265
  %v1922 = vunpack.c.h.b16 %v1265
  %v1923 = vunpack.c.l.b16 %v1266
  %v1924 = vunpack.c.l.b16 %v1267
  %v1925 = vunpack.c.h.b16 %v1267
  %v1926 = vunpack.c.l.b16 %v1268
  %v1927 = vunpack.c.l.b16 %v1269
  %v1928 = vunpack.c.h.b16 %v1269
  %v1929 = vunpack.c.l.b16 %v1270
  %v1930 = vunpack.c.l.b16 %v1271
  %v1931 = vunpack.c.h.b16 %v1271
  %v1932 = vunpack.c.l.b16 %v1272
  %v1933 = vunpack.c.l.b16 %v1273
  %v1934 = vunpack.c.h.b16 %v1273
  %v1935 = vunpack.c.l.b16 %v1274
  %v1936 = vunpack.c.l.b16 %v1275
  %v1937 = vunpack.c.h.b16 %v1275
  %v1938 = vunpack.c.l.b16 %v1276
  %v1939 = vunpack.c.l.b16 %v1277
  %v1940 = vunpack.c.h.b16 %v1277
  %v1941 = vunpack.c.l.b16 %v1278
  %v1942 = vunpack.c.l.b16 %v1279
  %v1943 = vunpack.c.h.b16 %v1279
  %v1944 = vunpack.c.l.b16 %v1280
  %v1945 = vunpack.c.l.b16 %v1281
  %v1946 = vunpack.c.h.b16 %v1281
  %v1947 = vunpack.c.l.b16 %v1282
  %v1948 = vunpack.c.l.b16 %v1283
  %v1949 = vunpack.c.h.b16 %v1283
  %v1950 = vunpack.c.l.b16 %v1284
  %v1951 = vunpack.c.l.b16 %v1285
  %v1952 = vunpack.c.h.b16 %v1285
  %v1953 = vunpack.c.l.b16 %v1286
  %v1954 = vunpack.c.l.b16 %v1287
  %v1955 = vunpack.c.h.b16 %v1287
  %v1956 = vunpack.c.l.b16 %v1288
  %v1957 = vunpack.c.l.b16 %v1289
  %v1958 = vunpack.c.h.b16 %v1289
  %v1959 = vunpack.c.l.b16 %v1290
  %v1960 = vunpack.c.l.b16 %v1291
  %v1961 = vunpack.c.h.b16 %v1291
  %v1962 = vunpack.c.l.b16 %v1292
  %v1963 = vunpack.c.l.b16 %v1293
  %v1964 = vunpack.c.h.b16 %v1293
  %v1965 = vunpack.c.l.b16 %v1294
  %v1966 = vunpack.c.l.b16 %v1295
  %v1967 = vunpack.c.h.b16 %v1295
  %v1968 = vunpack.c.l.b16 %v1296
  %v1969 = vunpack.c.l.b16 %v1297
  %v1970 = vunpack.c.h.b16 %v1297
  %v1971 = vunpack.c.l.b16 %v1298
  %v1972 = vunpack.c.l.b16 %v1299
  %v1973 = vunpack.c.h.b16 %v1299
  %v1974 = vunpack.c.l.b16 %v1300
  %v1975 = vunpack.c.l.b16 %v1301
  %v1976 = vunpack.c.h.b16 %v1301
  %v1977 = vunpack.c.l.b16 %v1302
  %v1978 = vunpack.c.l.b16 %v1303
  %v1979 = vunpack.c.h.b16 %v1303
  %v1980 = vunpack.c.l.b16 %v1304
  %v1981 = vunpack.c.l.b16 %v1305
  %v1982 = vunpack.c.h.b16 %v1305
  %v1983 = vunpack.c.l.b16 %v1306
  %v1984 = vunpack.c.l.b16 %v1307
  %v1985 = vunpack.c.h.b16 %v1307
  %v1986 = vunpack.c.l.b16 %v1308
  %v1987 = vunpack.c.l.b16 %v1309
  %v1988 = vunpack.c.h.b16 %v1309
  %v1989 = vunpack.c.l.b16 %v1310
  %v1990 = vunpack.c.l.b16 %v1311
  %v1991 = vunpack.c.h.b16 %v1311
  %v1992 = vunpack.c.l.b16 %v1312
  %v1993 = vunpack.c.l.b16 %v1313
  %v1994 = vunpack.c.h.b16 %v1313
  %v1995 = vunpack.c.l.b16 %v1314
  %v1996 = vunpack.c.l.b16 %v1315
  %v1997 = vunpack.c.h.b16 %v1315
  %v1998 = vunpack.c.l.b16 %v1316
  %v1999 = vunpack.c.l.b16 %v1317
  %v2000 = vunpack.c.h.b16 %v1317
  %v2001 = vunpack.c.l.b16 %v1318
  %v2002 = vunpack.c.l.b16 %v1319
  %v2003 = vunpack.c.h.b16 %v1319
  %v2004 = vunpack.c.l.b16 %v1320
  %v2005 = vunpack.c.l.b16 %v1321
  %v2006 = vunpack.c.h.b16 %v1321
  %v2007 = vunpack.c.l.b16 %v1322
  %v2008 = vpack.c.b16 %v1627, %v1624
  %v2009 = vpack.c.b16 %v1628, %v1625
  %v2010 = vpack.c.b16 %v1629, %v1626
  %v2011 = vpack.c.b16 %v1633, %v1630
  %v2012 = vpack.c.b16 %v1634, %v1631
  %v2013 = vpack.c.b16 %v1635, %v1632
  %v2014 = vpack.c.b16 %v1639, %v1636
  %v2015 = vpack.c.b16 %v1640, %v1637
  %v2016 = vpack.c.b16 %v1641, %v1638
  %v2017 = vpack.c.b16 %v1645, %v1642
  %v2018 = vpack.c.b16 %v1646, %v1643
  %v2019 = vpack.c.b16 %v1647, %v1644
  %v2020 = vpack.c.b16 %v1651, %v1648
  %v2021 = vpack.c.b16 %v1652, %v1649
  %v2022 = vpack.c.b16 %v1653, %v1650
  %v2023 = vpack.c.b16 %v1657, %v1654
  %v2024 = vpack.c.b16 %v1658, %v1655
  %v2025 = vpack.c.b16 %v1659, %v1656
  %v2026 = vpack.c.b16 %v1663, %v1660
  %v2027 = vpack.c.b16 %v1664, %v1661
  %v2028 = vpack.c.b16 %v1665, %v1662
  %v2029 = vpack.c.b16 %v1669, %v1666
  %v2030 = vpack.c.b16 %v1670, %v1667
  %v2031 = vpack.c.b16 %v1671, %v1668
  %v2032 = vpack.c.b16 %v1675, %v1672
  %v2033 = vpack.c.b16 %v1676, %v1673
  %v2034 = vpack.c.b16 %v1677, %v1674
  %v2035 = vpack.c.b16 %v1681, %v1678
  %v2036 = vpack.c.b16 %v1682, %v1679
  %v2037 = vpack.c.b16 %v1683, %v1680
  %v2038 = vpack.c.b16 %v1687, %v1684
  %v2039 = vpack.c.b16 %v1688, %v1685
  %v2040 = vpack.c.b16 %v1689, %v1686
  %v2041 = vpack.c.b16 %v1693, %v1690
  %v2042 = vpack.c.b16 %v1694, %v1691
  %v2043 = vpack.c.b16 %v1695, %v1692
  %v2044 = vpack.c.b16 %v1699, %v1696
  %v2045 = vpack.c.b16 %v1700, %v1697
  %v2046 = vpack.c.b16 %v1701, %v1698
  %v2047 = vpack.c.b16 %v1705, %v1702
  %v2048 = vpack.c.b16 %v1706, %v1703
  %v2049 = vpack.c.b16 %v1707, %v1704
  %v2050 = vpack.c.b16 %v1711, %v1708
  %v2051 = vpack.c.b16 %v1712, %v1709
  %v2052 = vpack.c.b16 %v1713, %v1710
  %v2053 = vpack.c.b16 %v1717, %v1714
  %v2054 = vpack.c.b16 %v1718, %v1715
  %v2055 = vpack.c.b16 %v1719, %v1716
  %v2056 = vpack.c.b16 %v1723, %v1720
  %v2057 = vpack.c.b16 %v1724, %v1721
  %v2058 = vpack.c.b16 %v1725, %v1722
  %v2059 = vpack.c.b16 %v1729, %v1726
  %v2060 = vpack.c.b16 %v1730, %v1727
  %v2061 = vpack.c.b16 %v1731, %v1728
  %v2062 = vpack.c.b16 %v1735, %v1732
  %v2063 = vpack.c.b16 %v1736, %v1733
  %v2064 = vpack.c.b16 %v1737, %v1734
  %v2065 = vpack.c.b16 %v1741, %v1738
  %v2066 = vpack.c.b16 %v1742, %v1739
  %v2067 = vpack.c.b16 %v1743, %v1740
  %v2068 = vpack.c.b16 %v1747, %v1744
  %v2069 = vpack.c.b16 %v1748, %v1745
  %v2070 = vpack.c.b16 %v1749, %v1746
  %v2071 = vpack.c.b16 %v1753, %v1750
  %v2072 = vpack.c.b16 %v1754, %v1751
  %v2073 = vpack.c.b16 %v1755, %v1752
  %v2074 = vpack.c.b16 %v1759, %v1756
  %v2075 = vpack.c.b16 %v1760, %v1757
  %v2076 = vpack.c.b16 %v1761, %v1758
  %v2077 = vpack.c.b16 %v1765, %v1762
  %v2078 = vpack.c.b16 %v1766, %v1763
  %v2079 = vpack.c.b16 %v1767, %v1764
  %v2080 = vpack.c.b16 %v1771, %v1768
  %v2081 = vpack.c.b16 %v1772, %v1769
  %v2082 = vpack.c.b16 %v1773, %v1770
  %v2083 = vpack.c.b16 %v1777, %v1774
  %v2084 = vpack.c.b16 %v1778, %v1775
  %v2085 = vpack.c.b16 %v1779, %v1776
  %v2086 = vpack.c.b16 %v1783, %v1780
  %v2087 = vpack.c.b16 %v1784, %v1781
  %v2088 = vpack.c.b16 %v1785, %v1782
  %v2089 = vpack.c.b16 %v1789, %v1786
  %v2090 = vpack.c.b16 %v1790, %v1787
  %v2091 = vpack.c.b16 %v1791, %v1788
  %v2092 = vpack.c.b16 %v1795, %v1792
  %v2093 = vpack.c.b16 %v1796, %v1793
  %v2094 = vpack.c.b16 %v1797, %v1794
  %v2095 = vpack.c.b16 %v1801, %v1798
  %v2096 = vpack.c.b16 %v1802, %v1799
  %v2097 = vpack.c.b16 %v1803, %v1800
  %v2098 = vpack.c.b16 %v1807, %v1804
  %v2099 = vpack.c.b16 %v1808, %v1805
  %v2100 = vpack.c.b16 %v1809, %v1806
  %v2101 = vpack.c.b16 %v1813, %v1810
  %v2102 = vpack.c.b16 %v1814, %v1811
  %v2103 = vpack.c.b16 %v1815, %v1812
  %v2104 = vpack.c.b16 %v1819, %v1816
  %v2105 = vpack.c.b16 %v1820, %v1817
  %v2106 = vpack.c.b16 %v1821, %v1818
  %v2107 = vpack.c.b16 %v1825, %v1822
  %v2108 = vpack.c.b16 %v1826, %v1823
  %v2109 = vpack.c.b16 %v1827, %v1824
  %v2110 = vpack.c.b16 %v1831, %v1828
  %v2111 = vpack.c.b16 %v1832, %v1829
  %v2112 = vpack.c.b16 %v1833, %v1830
  %v2113 = vpack.c.b16 %v1837, %v1834
  %v2114 = vpack.c.b16 %v1838, %v1835
  %v2115 = vpack.c.b16 %v1839, %v1836
  %v2116 = vpack.c.b16 %v1843, %v1840
  %v2117 = vpack.c.b16 %v1844, %v1841
  %v2118 = vpack.c.b16 %v1845, %v1842
  %v2119 = vpack.c.b16 %v1849, %v1846
  %v2120 = vpack.c.b16 %v1850, %v1847
  %v2121 = vpack.c.b16 %v1851, %v1848
  %v2122 = vpack.c.b16 %v1855, %v1852
  %v2123 = vpack.c.b16 %v1856, %v1853
  %v2124 = vpack.c.b16 %v1857, %v1854
  %v2125 = vpack.c.b16 %v1861, %v1858
  %v2126 = vpack.c.b16 %v1862, %v1859
  %v2127 = vpack.c.b16 %v1863, %v1860
  %v2128 = vpack.c.b16 %v1867, %v1864
  %v2129 = vpack.c.b16 %v1868, %v1865
  %v2130 = vpack.c.b16 %v1869, %v1866
  %v2131 = vpack.c.b16 %v1873, %v1870
  %v2132 = vpack.c.b16 %v1874, %v1871
  %v2133 = vpack.c.b16 %v1875, %v1872
  %v2134 = vpack.c.b16 %v1879, %v1876
  %v2135 = vpack.c.b16 %v1880, %v1877
  %v2136 = vpack.c.b16 %v1881, %v1878
  %v2137 = vpack.c.b16 %v1885, %v1882
  %v2138 = vpack.c.b16 %v1886, %v1883
  %v2139 = vpack.c.b16 %v1887, %v1884
  %v2140 = vpack.c.b16 %v1891, %v1888
  %v2141 = vpack.c.b16 %v1892, %v1889
  %v2142 = vpack.c.b16 %v1893, %v1890
  %v2143 = vpack.c.b16 %v1897, %v1894
  %v2144 = vpack.c.b16 %v1898, %v1895
  %v2145 = vpack.c.b16 %v1899, %v1896
  %v2146 = vpack.c.b16 %v1903, %v1900
  %v2147 = vpack.c.b16 %v1904, %v1901
  %v2148 = vpack.c.b16 %v1905, %v1902
  %v2149 = vpack.c.b16 %v1909, %v1906
  %v2150 = vpack.c.b16 %v1910, %v1907
  %v2151 = vpack.c.b16 %v1911, %v1908
  %v2152 = vpack.c.b16 %v1915, %v1912
  %v2153 = vpack.c.b16 %v1916, %v1913
  %v2154 = vpack.c.b16 %v1917, %v1914
  %v2155 = vpack.c.b16 %v1921, %v1918
  %v2156 = vpack.c.b16 %v1922, %v1919
  %v2157 = vpack.c.b16 %v1923, %v1920
  %v2158 = vpack.c.b16 %v1927, %v1924
  %v2159 = vpack.c.b16 %v1928, %v1925
  %v2160 = vpack.c.b16 %v1929, %v1926
  %v2161 = vpack.c.b16 %v1933, %v1930
  %v2162 = vpack.c.b16 %v1934, %v1931
  %v2163 = vpack.c.b16 %v1935, %v1932
  %v2164 = vpack.c.b16 %v1939, %v1936
  %v2165 = vpack.c.b16 %v1940, %v1937
  %v2166 = vpack.c.b16 %v1941, %v1938
  %v2167 = vpack.c.b16 %v1945, %v1942
  %v2168 = vpack.c.b16 %v1946, %v1943
  %v2169 = vpack.c.b16 %v1947, %v1944
  %v2170 = vpack.c.b16 %v1951, %v1948
  %v2171 = vpack.c.b16 %v1952, %v1949
  %v2172 = vpack.c.b16 %v1953, %v1950
  %v2173 = vpack.c.b16 %v1957, %v1954
  %v2174 = vpack.c.b16 %v1958, %v1955
  %v2175 = vpack.c.b16 %v1959, %v1956
  %v2176 = vpack.c.b16 %v1963, %v1960
  %v2177 = vpack.c.b16 %v1964, %v1961
  %v2178 = vpack.c.b16 %v1965, %v1962
  %v2179 = vpack.c.b16 %v1969, %v1966
  %v2180 = vpack.c.b16 %v1970, %v1967
  %v2181 = vpack.c.b16 %v1971, %v1968
  %v2182 = vpack.c.b16 %v1975, %v1972
  %v2183 = vpack.c.b16 %v1976, %v1973
  %v2184 = vpack.c.b16 %v1977, %v1974
  %v2185 = vpack.c.b16 %v1981, %v1978
  %v2186 = vpack.c.b16 %v1982, %v1979
  %v2187 = vpack.c.b16 %v1983, %v1980
  %v2188 = vpack.c.b16 %v1987, %v1984
  %v2189 = vpack.c.b16 %v1988, %v1985
  %v2190 = vpack.c.b16 %v1989, %v1986
  %v2191 = vpack.c.b16 %v1993, %v1990
  %v2192 = vpack.c.b16 %v1994, %v1991
  %v2193 = vpack.c.b16 %v1995, %v1992
  %v2194 = vpack.c.b16 %v1999, %v1996
  %v2195 = vpack.c.b16 %v2000, %v1997
  %v2196 = vpack.c.b16 %v2001, %v1998
  %v2197 = vpack.c.b16 %v2005, %v2002
  %v2198 = vpack.c.b16 %v2006, %v2003
  %v2199 = vpack.c.b16 %v2007, %v2004
  %2392 = vmatprep.subr.bf16.mxu0 %v2009
  %2393 = vmatpush1.bf16.msra.mxu0 %v2008
  %2394 = vmatprep.subr.bf16.mxu0 %v2012
  %2395 = vmatpush1.bf16.msra.mxu0 %v2011
  %2396 = vmatprep.subr.bf16.mxu0 %v2015
  %2397 = vmatpush1.bf16.msra.mxu0 %v2014
  %2398 = vmatprep.subr.bf16.mxu0 %v2018
  %2399 = vmatpush1.bf16.msra.mxu0 %v2017
  %2400 = vmatprep.subr.bf16.mxu0 %v2021
  %2401 = vmatpush1.bf16.msra.mxu0 %v2020
  %2402 = vmatprep.subr.bf16.mxu0 %v2024
  %2403 = vmatpush1.bf16.msra.mxu0 %v2023
  %2404 = vmatprep.subr.bf16.mxu0 %v2027
  %2405 = vmatpush1.bf16.msra.mxu0 %v2026
  %2406 = vmatprep.subr.bf16.mxu0 %v2030
  %2407 = vmatpush1.bf16.msra.mxu0 %v2029
  %2408 = vmatprep.subr.bf16.mxu0 %v2033
  %2409 = vmatpush1.bf16.msra.mxu0 %v2032
  %2410 = vmatprep.subr.bf16.mxu0 %v2036
  %2411 = vmatpush1.bf16.msra.mxu0 %v2035
  %2412 = vmatprep.subr.bf16.mxu0 %v2039
  %2413 = vmatpush1.bf16.msra.mxu0 %v2038
  %2414 = vmatprep.subr.bf16.mxu0 %v2042
  %2415 = vmatpush1.bf16.msra.mxu0 %v2041
  %2416 = vmatprep.subr.bf16.mxu0 %v2045
  %2417 = vmatpush1.bf16.msra.mxu0 %v2044
  %2418 = vmatprep.subr.bf16.mxu0 %v2048
  %2419 = vmatpush1.bf16.msra.mxu0 %v2047
  %2420 = vmatprep.subr.bf16.mxu0 %v2051
  %2421 = vmatpush1.bf16.msra.mxu0 %v2050
  %2422 = vmatprep.subr.bf16.mxu0 %v2054
  %2423 = vmatpush1.bf16.msra.mxu0 %v2053
  %2424 = vmatprep.mubr.bf16.mxu0 %v1353
  %2425 = vmatmul.mubr.bf16.gmra.mrb[0].mxu0 %v1352
  %v2426 = vpop.f32.mrb[0].mxu0
  %v2427 = vadd.f32 %v1328, %v2426
  %v2428 = vpop.f32.mrb[0].mxu0
  %v2429 = vadd.f32 %v1332, %v2428
  %v2430 = vpop.f32.mrb[0].mxu0
  %v2431 = vpop.f32.mrb[0].mxu0
  %2432 = vdwg.mxu0
  %2433 = vmatprep.subr.bf16.mxu0 %v2057
  %2434 = vmatpush1.bf16.msra.mxu0 %v2056
  %2435 = vmatprep.subr.bf16.mxu0 %v2060
  %2436 = vmatpush1.bf16.msra.mxu0 %v2059
  %2437 = vmatprep.subr.bf16.mxu0 %v2063
  %2438 = vmatpush1.bf16.msra.mxu0 %v2062
  %2439 = vmatprep.subr.bf16.mxu0 %v2066
  %2440 = vmatpush1.bf16.msra.mxu0 %v2065
  %2441 = vmatprep.subr.bf16.mxu0 %v2069
  %2442 = vmatpush1.bf16.msra.mxu0 %v2068
  %2443 = vmatprep.subr.bf16.mxu0 %v2072
  %2444 = vmatpush1.bf16.msra.mxu0 %v2071
  %2445 = vmatprep.subr.bf16.mxu0 %v2075
  %2446 = vmatpush1.bf16.msra.mxu0 %v2074
  %2447 = vmatprep.subr.bf16.mxu0 %v2078
  %2448 = vmatpush1.bf16.msra.mxu0 %v2077
  %2449 = vmatprep.subr.bf16.mxu0 %v2081
  %2450 = vmatpush1.bf16.msra.mxu0 %v2080
  %2451 = vmatprep.subr.bf16.mxu0 %v2084
  %2452 = vmatpush1.bf16.msra.mxu0 %v2083
  %2453 = vmatprep.subr.bf16.mxu0 %v2087
  %2454 = vmatpush1.bf16.msra.mxu0 %v2086
  %2455 = vmatprep.subr.bf16.mxu0 %v2090
  %2456 = vmatpush1.bf16.msra.mxu0 %v2089
  %2457 = vmatprep.subr.bf16.mxu0 %v2093
  %2458 = vmatpush1.bf16.msra.mxu0 %v2092
  %2459 = vmatprep.subr.bf16.mxu0 %v2096
  %2460 = vmatpush1.bf16.msra.mxu0 %v2095
  %2461 = vmatprep.subr.bf16.mxu0 %v2099
  %2462 = vmatpush1.bf16.msra.mxu0 %v2098
  %2463 = vmatprep.subr.bf16.mxu0 %v2102
  %2464 = vmatpush1.bf16.msra.mxu0 %v2101
  %2465 = vmatprep.mubr.bf16.mxu0 %v1355
  %2466 = vmatmul.mubr.bf16.gmra.mrb[0].mxu0 %v1354
  %v2467 = vpop.f32.mrb[0].mxu0
  %v2468 = vadd.f32 %v2427, %v2467
  %v2469 = vpop.f32.mrb[0].mxu0
  %v2470 = vadd.f32 %v2429, %v2469
  %v2471 = vpop.f32.mrb[0].mxu0
  %v2472 = vpop.f32.mrb[0].mxu0
  %2473 = vdwg.mxu0
  %2474 = vmatprep.subr.bf16.mxu0 %v2105
  %2475 = vmatpush1.bf16.msra.mxu0 %v2104
  %2476 = vmatprep.subr.bf16.mxu0 %v2108
  %2477 = vmatpush1.bf16.msra.mxu0 %v2107
  %2478 = vmatprep.subr.bf16.mxu0 %v2111
  %2479 = vmatpush1.bf16.msra.mxu0 %v2110
  %2480 = vmatprep.subr.bf16.mxu0 %v2114
  %2481 = vmatpush1.bf16.msra.mxu0 %v2113
  %2482 = vmatprep.subr.bf16.mxu0 %v2117
  %2483 = vmatpush1.bf16.msra.mxu0 %v2116
  %2484 = vmatprep.subr.bf16.mxu0 %v2120
  %2485 = vmatpush1.bf16.msra.mxu0 %v2119
  %2486 = vmatprep.subr.bf16.mxu0 %v2123
  %2487 = vmatpush1.bf16.msra.mxu0 %v2122
  %2488 = vmatprep.subr.bf16.mxu0 %v2126
  %2489 = vmatpush1.bf16.msra.mxu0 %v2125
  %2490 = vmatprep.subr.bf16.mxu0 %v2129
  %2491 = vmatpush1.bf16.msra.mxu0 %v2128
  %2492 = vmatprep.subr.bf16.mxu0 %v2132
  %2493 = vmatpush1.bf16.msra.mxu0 %v2131
  %2494 = vmatprep.subr.bf16.mxu0 %v2135
  %2495 = vmatpush1.bf16.msra.mxu0 %v2134
  %2496 = vmatprep.subr.bf16.mxu0 %v2138
  %2497 = vmatpush1.bf16.msra.mxu0 %v2137
  %2498 = vmatprep.subr.bf16.mxu0 %v2141
  %2499 = vmatpush1.bf16.msra.mxu0 %v2140
  %2500 = vmatprep.subr.bf16.mxu0 %v2144
  %2501 = vmatpush1.bf16.msra.mxu0 %v2143
  %2502 = vmatprep.subr.bf16.mxu0 %v2147
  %2503 = vmatpush1.bf16.msra.mxu0 %v2146
  %2504 = vmatprep.subr.bf16.mxu0 %v2150
  %2505 = vmatpush1.bf16.msra.mxu0 %v2149
  %2506 = vmatprep.mubr.bf16.mxu0 %v1357
  %2507 = vmatmul.mubr.bf16.gmra.mrb[0].mxu0 %v1356
  %v2508 = vpop.f32.mrb[0].mxu0
  %v2509 = vadd.f32 %v2468, %v2508
  %v2510 = vpop.f32.mrb[0].mxu0
  %v2511 = vadd.f32 %v2470, %v2510
  %v2512 = vpop.f32.mrb[0].mxu0
  %v2513 = vpop.f32.mrb[0].mxu0
  %2514 = vdwg.mxu0
  %2515 = vmatprep.subr.bf16.mxu0 %v2153
  %2516 = vmatpush1.bf16.msra.mxu0 %v2152
  %2517 = vmatprep.subr.bf16.mxu0 %v2156
  %2518 = vmatpush1.bf16.msra.mxu0 %v2155
  %2519 = vmatprep.subr.bf16.mxu0 %v2159
  %2520 = vmatpush1.bf16.msra.mxu0 %v2158
  %2521 = vmatprep.subr.bf16.mxu0 %v2162
  %2522 = vmatpush1.bf16.msra.mxu0 %v2161
  %2523 = vmatprep.subr.bf16.mxu0 %v2165
  %2524 = vmatpush1.bf16.msra.mxu0 %v2164
  %2525 = vmatprep.subr.bf16.mxu0 %v2168
  %2526 = vmatpush1.bf16.msra.mxu0 %v2167
  %2527 = vmatprep.subr.bf16.mxu0 %v2171
  %2528 = vmatpush1.bf16.msra.mxu0 %v2170
  %2529 = vmatprep.subr.bf16.mxu0 %v2174
  %2530 = vmatpush1.bf16.msra.mxu0 %v2173
  %2531 = vmatprep.subr.bf16.mxu0 %v2177
  %2532 = vmatpush1.bf16.msra.mxu0 %v2176
  %2533 = vmatprep.subr.bf16.mxu0 %v2180
  %2534 = vmatpush1.bf16.msra.mxu0 %v2179
  %2535 = vmatprep.subr.bf16.mxu0 %v2183
  %2536 = vmatpush1.bf16.msra.mxu0 %v2182
  %2537 = vmatprep.subr.bf16.mxu0 %v2186
  %2538 = vmatpush1.bf16.msra.mxu0 %v2185
  %2539 = vmatprep.subr.bf16.mxu0 %v2189
  %2540 = vmatpush1.bf16.msra.mxu0 %v2188
  %2541 = vmatprep.subr.bf16.mxu0 %v2192
  %2542 = vmatpush1.bf16.msra.mxu0 %v2191
  %2543 = vmatprep.subr.bf16.mxu0 %v2195
  %2544 = vmatpush1.bf16.msra.mxu0 %v2194
  %2545 = vmatprep.subr.bf16.mxu0 %v2198
  %2546 = vmatpush1.bf16.msra.mxu0 %v2197
  %2547 = vmatprep.mubr.bf16.mxu0 %v1359
  %2548 = vmatmul.mubr.bf16.gmra.mrb[0].mxu0 %v1358
  %v2549 = vpop.f32.mrb[0].mxu0
  %v2550 = vadd.f32 %v2509, %v2549
  %v2551 = vpop.f32.mrb[0].mxu0
  %v2552 = vadd.f32 %v2511, %v2551
  %v2553 = vpop.f32.mrb[0].mxu0
  %v2554 = vpop.f32.mrb[0].mxu0
  %2555 = vdwg.mxu0
  %2556 = vmatprep.subr.bf16.mxu0 0
  %2557 = vmatpush1.bf16.msra.mxu0 %v2010
  %2558 = vmatprep.subr.bf16.mxu0 0
  %2559 = vmatpush1.bf16.msra.mxu0 %v2013
  %2560 = vmatprep.subr.bf16.mxu0 0
  %2561 = vmatpush1.bf16.msra.mxu0 %v2016
  %2562 = vmatprep.subr.bf16.mxu0 0
  %2563 = vmatpush1.bf16.msra.mxu0 %v2019
  %2564 = vmatprep.subr.bf16.mxu0 0
  %2565 = vmatpush1.bf16.msra.mxu0 %v2022
  %2566 = vmatprep.subr.bf16.mxu0 0
  %2567 = vmatpush1.bf16.msra.mxu0 %v2025
  %2568 = vmatprep.subr.bf16.mxu0 0
  %2569 = vmatpush1.bf16.msra.mxu0 %v2028
  %2570 = vmatprep.subr.bf16.mxu0 0
  %2571 = vmatpush1.bf16.msra.mxu0 %v2031
  %2572 = vmatprep.subr.bf16.mxu0 0
  %2573 = vmatpush1.bf16.msra.mxu0 %v2034
  %2574 = vmatprep.subr.bf16.mxu0 0
  %2575 = vmatpush1.bf16.msra.mxu0 %v2037
  %2576 = vmatprep.subr.bf16.mxu0 0
  %2577 = vmatpush1.bf16.msra.mxu0 %v2040
  %2578 = vmatprep.subr.bf16.mxu0 0
  %2579 = vmatpush1.bf16.msra.mxu0 %v2043
  %2580 = vmatprep.subr.bf16.mxu0 0
  %2581 = vmatpush1.bf16.msra.mxu0 %v2046
  %2582 = vmatprep.subr.bf16.mxu0 0
  %2583 = vmatpush1.bf16.msra.mxu0 %v2049
  %2584 = vmatprep.subr.bf16.mxu0 0
  %2585 = vmatpush1.bf16.msra.mxu0 %v2052
  %2586 = vmatprep.subr.bf16.mxu0 0
  %2587 = vmatpush1.bf16.msra.mxu0 %v2055
  %2588 = vmatprep.mubr.bf16.mxu0 %v1353
  %2589 = vmatmul.mubr.bf16.gmra.mrb[0].mxu0 %v1352
  %v2590 = vpop.f32.mrb[0].mxu0
  %v2591 = vadd.f32 %v1336, %v2590
  %v2592 = vpop.f32.mrb[0].mxu0
  %v2593 = vpop.f32.mrb[0].mxu0
  %v2594 = vpop.f32.mrb[0].mxu0
  %2595 = vdwg.mxu0
  %2596 = vmatprep.subr.bf16.mxu0 0
  %2597 = vmatpush1.bf16.msra.mxu0 %v2058
  %2598 = vmatprep.subr.bf16.mxu0 0
  %2599 = vmatpush1.bf16.msra.mxu0 %v2061
  %2600 = vmatprep.subr.bf16.mxu0 0
  %2601 = vmatpush1.bf16.msra.mxu0 %v2064
  %2602 = vmatprep.subr.bf16.mxu0 0
  %2603 = vmatpush1.bf16.msra.mxu0 %v2067
  %2604 = vmatprep.subr.bf16.mxu0 0
  %2605 = vmatpush1.bf16.msra.mxu0 %v2070
  %2606 = vmatprep.subr.bf16.mxu0 0
  %2607 = vmatpush1.bf16.msra.mxu0 %v2073
  %2608 = vmatprep.subr.bf16.mxu0 0
  %2609 = vmatpush1.bf16.msra.mxu0 %v2076
  %2610 = vmatprep.subr.bf16.mxu0 0
  %2611 = vmatpush1.bf16.msra.mxu0 %v2079
  %2612 = vmatprep.subr.bf16.mxu0 0
  %2613 = vmatpush1.bf16.msra.mxu0 %v2082
  %2614 = vmatprep.subr.bf16.mxu0 0
  %2615 = vmatpush1.bf16.msra.mxu0 %v2085
  %2616 = vmatprep.subr.bf16.mxu0 0
  %2617 = vmatpush1.bf16.msra.mxu0 %v2088
  %2618 = vmatprep.subr.bf16.mxu0 0
  %2619 = vmatpush1.bf16.msra.mxu0 %v2091
  %2620 = vmatprep.subr.bf16.mxu0 0
  %2621 = vmatpush1.bf16.msra.mxu0 %v2094
  %2622 = vmatprep.subr.bf16.mxu0 0
  %2623 = vmatpush1.bf16.msra.mxu0 %v2097
  %2624 = vmatprep.subr.bf16.mxu0 0
  %2625 = vmatpush1.bf16.msra.mxu0 %v2100
  %2626 = vmatprep.subr.bf16.mxu0 0
  %2627 = vmatpush1.bf16.msra.mxu0 %v2103
  %2628 = vmatprep.mubr.bf16.mxu0 %v1355
  %2629 = vmatmul.mubr.bf16.gmra.mrb[0].mxu0 %v1354
  %v2630 = vpop.f32.mrb[0].mxu0
  %v2631 = vadd.f32 %v2591, %v2630
  %v2632 = vpop.f32.mrb[0].mxu0
  %v2633 = vpop.f32.mrb[0].mxu0
  %v2634 = vpop.f32.mrb[0].mxu0
  %2635 = vdwg.mxu0
  %2636 = vmatprep.subr.bf16.mxu0 0
  %2637 = vmatpush1.bf16.msra.mxu0 %v2106
  %2638 = vmatprep.subr.bf16.mxu0 0
  %2639 = vmatpush1.bf16.msra.mxu0 %v2109
  %2640 = vmatprep.subr.bf16.mxu0 0
  %2641 = vmatpush1.bf16.msra.mxu0 %v2112
  %2642 = vmatprep.subr.bf16.mxu0 0
  %2643 = vmatpush1.bf16.msra.mxu0 %v2115
  %2644 = vmatprep.subr.bf16.mxu0 0
  %2645 = vmatpush1.bf16.msra.mxu0 %v2118
  %2646 = vmatprep.subr.bf16.mxu0 0
  %2647 = vmatpush1.bf16.msra.mxu0 %v2121
  %2648 = vmatprep.subr.bf16.mxu0 0
  %2649 = vmatpush1.bf16.msra.mxu0 %v2124
  %2650 = vmatprep.subr.bf16.mxu0 0
  %2651 = vmatpush1.bf16.msra.mxu0 %v2127
  %2652 = vmatprep.subr.bf16.mxu0 0
  %2653 = vmatpush1.bf16.msra.mxu0 %v2130
  %2654 = vmatprep.subr.bf16.mxu0 0
  %2655 = vmatpush1.bf16.msra.mxu0 %v2133
  %2656 = vmatprep.subr.bf16.mxu0 0
  %2657 = vmatpush1.bf16.msra.mxu0 %v2136
  %2658 = vmatprep.subr.bf16.mxu0 0
  %2659 = vmatpush1.bf16.msra.mxu0 %v2139
  %2660 = vmatprep.subr.bf16.mxu0 0
  %2661 = vmatpush1.bf16.msra.mxu0 %v2142
  %2662 = vmatprep.subr.bf16.mxu0 0
  %2663 = vmatpush1.bf16.msra.mxu0 %v2145
  %2664 = vmatprep.subr.bf16.mxu0 0
  %2665 = vmatpush1.bf16.msra.mxu0 %v2148
  %2666 = vmatprep.subr.bf16.mxu0 0
  %2667 = vmatpush1.bf16.msra.mxu0 %v2151
  %2668 = vmatprep.mubr.bf16.mxu0 %v1357
  %2669 = vmatmul.mubr.bf16.gmra.mrb[0].mxu0 %v1356
  %v2670 = vpop.f32.mrb[0].mxu0
  %v2671 = vadd.f32 %v2631, %v2670
  %v2672 = vpop.f32.mrb[0].mxu0
  %v2673 = vpop.f32.mrb[0].mxu0
  %v2674 = vpop.f32.mrb[0].mxu0
  %2675 = vdwg.mxu0
  %2676 = vmatprep.subr.bf16.mxu0 0
  %2677 = vmatpush1.bf16.msra.mxu0 %v2154
  %2678 = vmatprep.subr.bf16.mxu0 0
  %2679 = vmatpush1.bf16.msra.mxu0 %v2157
  %2680 = vmatprep.subr.bf16.mxu0 0
  %2681 = vmatpush1.bf16.msra.mxu0 %v2160
  %2682 = vmatprep.subr.bf16.mxu0 0
  %2683 = vmatpush1.bf16.msra.mxu0 %v2163
  %2684 = vmatprep.subr.bf16.mxu0 0
  %2685 = vmatpush1.bf16.msra.mxu0 %v2166
  %2686 = vmatprep.subr.bf16.mxu0 0
  %2687 = vmatpush1.bf16.msra.mxu0 %v2169
  %2688 = vmatprep.subr.bf16.mxu0 0
  %2689 = vmatpush1.bf16.msra.mxu0 %v2172
  %2690 = vmatprep.subr.bf16.mxu0 0
  %2691 = vmatpush1.bf16.msra.mxu0 %v2175
  %2692 = vmatprep.subr.bf16.mxu0 0
  %2693 = vmatpush1.bf16.msra.mxu0 %v2178
  %2694 = vmatprep.subr.bf16.mxu0 0
  %2695 = vmatpush1.bf16.msra.mxu0 %v2181
  %2696 = vmatprep.subr.bf16.mxu0 0
  %2697 = vmatpush1.bf16.msra.mxu0 %v2184
  %2698 = vmatprep.subr.bf16.mxu0 0
  %2699 = vmatpush1.bf16.msra.mxu0 %v2187
  %2700 = vmatprep.subr.bf16.mxu0 0
  %2701 = vmatpush1.bf16.msra.mxu0 %v2190
  %2702 = vmatprep.subr.bf16.mxu0 0
  %2703 = vmatpush1.bf16.msra.mxu0 %v2193
  %2704 = vmatprep.subr.bf16.mxu0 0
  %2705 = vmatpush1.bf16.msra.mxu0 %v2196
  %2706 = vmatprep.subr.bf16.mxu0 0
  %2707 = vmatpush1.bf16.msra.mxu0 %v2199
  %2708 = vmatprep.mubr.bf16.mxu0 %v1359
  %2709 = vmatmul.mubr.bf16.gmra.mrb[0].mxu0 %v1358
  %v2710 = vpop.f32.mrb[0].mxu0
  %v2711 = vadd.f32 %v2671, %v2710
  %v2712 = vpop.f32.mrb[0].mxu0
  %v2713 = vpop.f32.mrb[0].mxu0
  %v2714 = vpop.f32.mrb[0].mxu0
  %2715 = vdwg.mxu0
  %vm2716 = vcmp.ge.f32.partialorder %v2550, 0.0
  %vm2717 = vcmp.ge.f32.partialorder %v2552, 0.0
  %vm2718 = vcmp.ge.f32.partialorder %v2711, 0.0
  %v2719 = vmul.f32 %v2550, 0.01
  %v2720 = vmul.f32 %v2552, 0.01
  %v2721 = vmul.f32 %v2711, 0.01
  %v2722 = vsel %vm2716, %v2550, %v2719
  %v2723 = vsel %vm2717, %v2552, %v2720
  %v2724 = vsel %vm2718, %v2711, %v2721
  %v2725 = vpack.c.bf16 %v2722, %v2722
  %v2726 = vpack.c.bf16 %v2723, %v2723
  %v2727 = vpack.c.bf16 %v2724, %v2724
  %v2728 = vld [vmem:[%s5] sm:$0xf]
  %v2729 = vld [vmem:[%s5 + $0x4] sm:$0xf]
  %v2730 = vld [vmem:[%s5 + $0x8] sm:$0xf]
  %v2731 = vld [vmem:[%s5 + $0xc] sm:$0xf]
  %v2732 = vld [vmem:[%s5 + $0x10] sm:$0xf]
  %v2733 = vld [vmem:[%s5 + $0x14] sm:$0xf]
  %v2734 = vld [vmem:[%s5 + $0x18] sm:$0xf]
  %v2735 = vld [vmem:[%s5 + $0x1c] sm:$0xf]
  %v2736 = vld [vmem:[%s5 + $0x20] sm:$0xf]
  %v2737 = vld [vmem:[%s5 + $0x24] sm:$0xf]
  %v2738 = vld [vmem:[%s5 + $0x28] sm:$0xf]
  %v2739 = vld [vmem:[%s5 + $0x2c] sm:$0xf]
  %v2740 = vld [vmem:[%s5 + $0x30] sm:$0xf]
  %v2741 = vld [vmem:[%s5 + $0x34] sm:$0xf]
  %v2742 = vld [vmem:[%s5 + $0x38] sm:$0xf]
  %v2743 = vld [vmem:[%s5 + $0x3c] sm:$0xf]
  %v2744 = vld [vmem:[%s5 + $0x40] sm:$0xf]
  %v2745 = vld [vmem:[%s5 + $0x44] sm:$0xf]
  %v2746 = vld [vmem:[%s5 + $0x48] sm:$0xf]
  %v2747 = vld [vmem:[%s5 + $0x4c] sm:$0xf]
  %v2748 = vld [vmem:[%s5 + $0x50] sm:$0xf]
  %v2749 = vld [vmem:[%s5 + $0x54] sm:$0xf]
  %v2750 = vld [vmem:[%s5 + $0x58] sm:$0xf]
  %v2751 = vld [vmem:[%s5 + $0x5c] sm:$0xf]
  %v2752 = vld [vmem:[%s5 + $0x60] sm:$0xf]
  %v2753 = vld [vmem:[%s5 + $0x64] sm:$0xf]
  %v2754 = vld [vmem:[%s5 + $0x68] sm:$0xf]
  %v2755 = vld [vmem:[%s5 + $0x6c] sm:$0xf]
  %v2756 = vld [vmem:[%s5 + $0x70] sm:$0xf]
  %v2757 = vld [vmem:[%s5 + $0x74] sm:$0xf]
  %v2758 = vld [vmem:[%s5 + $0x78] sm:$0xf]
  %v2759 = vld [vmem:[%s5 + $0x7c] sm:$0xf]
  %v2760 = vld [vmem:[%s5 + $0x80] sm:$0xf]
  %v2761 = vld [vmem:[%s5 + $0x84] sm:$0xf]
  %v2762 = vld [vmem:[%s5 + $0x88] sm:$0xf]
  %v2763 = vld [vmem:[%s5 + $0x8c] sm:$0xf]
  %v2764 = vld [vmem:[%s5 + $0x90] sm:$0xf]
  %v2765 = vld [vmem:[%s5 + $0x94] sm:$0xf]
  %v2766 = vld [vmem:[%s5 + $0x98] sm:$0xf]
  %v2767 = vld [vmem:[%s5 + $0x9c] sm:$0xf]
  %v2768 = vld [vmem:[%s5 + $0xa0] sm:$0xf]
  %v2769 = vld [vmem:[%s5 + $0xa4] sm:$0xf]
  %v2770 = vld [vmem:[%s5 + $0xa8] sm:$0xf]
  %v2771 = vld [vmem:[%s5 + $0xac] sm:$0xf]
  %v2772 = vld [vmem:[%s5 + $0xb0] sm:$0xf]
  %v2773 = vld [vmem:[%s5 + $0xb4] sm:$0xf]
  %v2774 = vld [vmem:[%s5 + $0xb8] sm:$0xf]
  %v2775 = vld [vmem:[%s5 + $0xbc] sm:$0xf]
  %v2776 = vld [vmem:[%s6] sm:$0x1]
  %v2778 = vlaneseq
  %v2779 = vshrl.u32 %v2778, 7
  %v2780 = vsub.s32 0, %v2779
  %v2781 = vrot.slane %v2776, %v2780
  %v2831 = vunpack.c.l.b16 %v2728
  %v2832 = vunpack.c.l.b16 %v2729
  %v2833 = vunpack.c.l.b16 %v2730
  %v2834 = vunpack.c.l.b16 %v2731
  %v2835 = vunpack.c.l.b16 %v2732
  %v2836 = vunpack.c.l.b16 %v2733
  %v2837 = vunpack.c.l.b16 %v2734
  %v2838 = vunpack.c.l.b16 %v2735
  %v2839 = vunpack.c.l.b16 %v2736
  %v2840 = vunpack.c.l.b16 %v2737
  %v2841 = vunpack.c.l.b16 %v2738
  %v2842 = vunpack.c.l.b16 %v2739
  %v2843 = vunpack.c.l.b16 %v2740
  %v2844 = vunpack.c.l.b16 %v2741
  %v2845 = vunpack.c.l.b16 %v2742
  %v2846 = vunpack.c.l.b16 %v2743
  %v2847 = vunpack.c.l.b16 %v2744
  %v2848 = vunpack.c.l.b16 %v2745
  %v2849 = vunpack.c.l.b16 %v2746
  %v2850 = vunpack.c.l.b16 %v2747
  %v2851 = vunpack.c.l.b16 %v2748
  %v2852 = vunpack.c.l.b16 %v2749
  %v2853 = vunpack.c.l.b16 %v2750
  %v2854 = vunpack.c.l.b16 %v2751
  %v2855 = vunpack.c.l.b16 %v2752
  %v2856 = vunpack.c.l.b16 %v2753
  %v2857 = vunpack.c.l.b16 %v2754
  %v2858 = vunpack.c.l.b16 %v2755
  %v2859 = vunpack.c.l.b16 %v2756
  %v2860 = vunpack.c.l.b16 %v2757
  %v2861 = vunpack.c.l.b16 %v2758
  %v2862 = vunpack.c.l.b16 %v2759
  %v2863 = vunpack.c.l.b16 %v2760
  %v2864 = vunpack.c.l.b16 %v2761
  %v2865 = vunpack.c.l.b16 %v2762
  %v2866 = vunpack.c.l.b16 %v2763
  %v2867 = vunpack.c.l.b16 %v2764
  %v2868 = vunpack.c.l.b16 %v2765
  %v2869 = vunpack.c.l.b16 %v2766
  %v2870 = vunpack.c.l.b16 %v2767
  %v2871 = vunpack.c.l.b16 %v2768
  %v2872 = vunpack.c.l.b16 %v2769
  %v2873 = vunpack.c.l.b16 %v2770
  %v2874 = vunpack.c.l.b16 %v2771
  %v2875 = vunpack.c.l.b16 %v2772
  %v2876 = vunpack.c.l.b16 %v2773
  %v2877 = vunpack.c.l.b16 %v2774
  %v2878 = vunpack.c.l.b16 %v2775
  %v2879 = vpack.c.b16 %v2832, %v2831
  %v2880 = vpack.c.b16 %v2834, %v2833
  %v2881 = vpack.c.b16 %v2836, %v2835
  %v2882 = vpack.c.b16 %v2838, %v2837
  %v2883 = vpack.c.b16 %v2840, %v2839
  %v2884 = vpack.c.b16 %v2842, %v2841
  %v2885 = vpack.c.b16 %v2844, %v2843
  %v2886 = vpack.c.b16 %v2846, %v2845
  %v2887 = vpack.c.b16 %v2848, %v2847
  %v2888 = vpack.c.b16 %v2850, %v2849
  %v2889 = vpack.c.b16 %v2852, %v2851
  %v2890 = vpack.c.b16 %v2854, %v2853
  %v2891 = vpack.c.b16 %v2856, %v2855
  %v2892 = vpack.c.b16 %v2858, %v2857
  %v2893 = vpack.c.b16 %v2860, %v2859
  %v2894 = vpack.c.b16 %v2862, %v2861
  %v2895 = vpack.c.b16 %v2864, %v2863
  %v2896 = vpack.c.b16 %v2866, %v2865
  %v2897 = vpack.c.b16 %v2868, %v2867
  %v2898 = vpack.c.b16 %v2870, %v2869
  %v2899 = vpack.c.b16 %v2872, %v2871
  %v2900 = vpack.c.b16 %v2874, %v2873
  %v2901 = vpack.c.b16 %v2876, %v2875
  %v2902 = vpack.c.b16 %v2878, %v2877
  %2927 = vmatprep.subr.bf16.mxu0 0
  %2928 = vmatpush1.bf16.msra.mxu0 %v2879
  %2929 = vmatprep.subr.bf16.mxu0 0
  %2930 = vmatpush1.bf16.msra.mxu0 %v2880
  %2931 = vmatprep.subr.bf16.mxu0 0
  %2932 = vmatpush1.bf16.msra.mxu0 %v2881
  %2933 = vmatprep.subr.bf16.mxu0 0
  %2934 = vmatpush1.bf16.msra.mxu0 %v2882
  %2935 = vmatprep.subr.bf16.mxu0 0
  %2936 = vmatpush1.bf16.msra.mxu0 %v2883
  %2937 = vmatprep.subr.bf16.mxu0 0
  %2938 = vmatpush1.bf16.msra.mxu0 %v2884
  %2939 = vmatprep.subr.bf16.mxu0 0
  %2940 = vmatpush1.bf16.msra.mxu0 %v2885
  %2941 = vmatprep.subr.bf16.mxu0 0
  %2942 = vmatpush1.bf16.msra.mxu0 %v2886
  %2943 = vmatprep.subr.bf16.mxu0 0
  %2944 = vmatpush1.bf16.msra.mxu0 %v2887
  %2945 = vmatprep.subr.bf16.mxu0 0
  %2946 = vmatpush1.bf16.msra.mxu0 %v2888
  %2947 = vmatprep.subr.bf16.mxu0 0
  %2948 = vmatpush1.bf16.msra.mxu0 %v2889
  %2949 = vmatprep.subr.bf16.mxu0 0
  %2950 = vmatpush1.bf16.msra.mxu0 %v2890
  %2951 = vmatprep.subr.bf16.mxu0 0
  %2952 = vmatpush1.bf16.msra.mxu0 %v2891
  %2953 = vmatprep.subr.bf16.mxu0 0
  %2954 = vmatpush1.bf16.msra.mxu0 %v2892
  %2955 = vmatprep.subr.bf16.mxu0 0
  %2956 = vmatpush1.bf16.msra.mxu0 %v2893
  %2957 = vmatprep.subr.bf16.mxu0 0
  %2958 = vmatpush1.bf16.msra.mxu0 %v2894
  %2959 = vmatprep.mubr.bf16.mxu0 %v2726
  %2960 = vmatmul.mubr.bf16.gmra.mrb[0].mxu0 %v2725
  %v2961 = vpop.f32.mrb[0].mxu0
  %v2962 = vadd.f32 %v2781, %v2961
  %v2963 = vpop.f32.mrb[0].mxu0
  %v2964 = vpop.f32.mrb[0].mxu0
  %v2965 = vpop.f32.mrb[0].mxu0
  %2966 = vdwg.mxu0
  %2967 = vmatprep.subr.bf16.mxu0 0
  %2968 = vmatpush1.bf16.msra.mxu0 %v2895
  %2969 = vmatprep.subr.bf16.mxu0 0
  %2970 = vmatpush1.bf16.msra.mxu0 %v2896
  %2971 = vmatprep.subr.bf16.mxu0 0
  %2972 = vmatpush1.bf16.msra.mxu0 %v2897
  %2973 = vmatprep.subr.bf16.mxu0 0
  %2974 = vmatpush1.bf16.msra.mxu0 %v2898
  %2975 = vmatprep.subr.bf16.mxu0 0
  %2976 = vmatpush1.bf16.msra.mxu0 %v2899
  %2977 = vmatprep.subr.bf16.mxu0 0
  %2978 = vmatpush1.bf16.msra.mxu0 %v2900
  %2979 = vmatprep.subr.bf16.mxu0 0
  %2980 = vmatpush1.bf16.msra.mxu0 %v2901
  %2981 = vmatprep.subr.bf16.mxu0 0
  %2982 = vmatpush1.bf16.msra.mxu0 %v2902
  %2983 = vmatprep.subr.bf16.mxu0 0
  %2984 = vmatpush1.bf16.msra.mxu0 0
  %2985 = vmatprep.subr.bf16.mxu0 0
  %2986 = vmatpush1.bf16.msra.mxu0 0
  %2987 = vmatprep.subr.bf16.mxu0 0
  %2988 = vmatpush1.bf16.msra.mxu0 0
  %2989 = vmatprep.subr.bf16.mxu0 0
  %2990 = vmatpush1.bf16.msra.mxu0 0
  %2991 = vmatprep.subr.bf16.mxu0 0
  %2992 = vmatpush1.bf16.msra.mxu0 0
  %2993 = vmatprep.subr.bf16.mxu0 0
  %2994 = vmatpush1.bf16.msra.mxu0 0
  %2995 = vmatprep.subr.bf16.mxu0 0
  %2996 = vmatpush1.bf16.msra.mxu0 0
  %2997 = vmatprep.subr.bf16.mxu0 0
  %2998 = vmatpush1.bf16.msra.mxu0 0
  %2999 = vmatprep.mubr.bf16.mxu0 0
  %3000 = vmatmul.mubr.bf16.gmra.mrb[0].mxu0 %v2727
  %v3001 = vpop.f32.mrb[0].mxu0
  %v3002 = vadd.f32 %v2962, %v3001
  %v3003 = vpop.f32.mrb[0].mxu0
  %v3004 = vpop.f32.mrb[0].mxu0
  %v3005 = vpop.f32.mrb[0].mxu0
  %3006 = vdwg.mxu0
  %3007 = vst [vmem:[%s7] sm:$0xff] %v3002
  // Predicated region
  $region30: #{classifier_forward.1} parent=0 // pred_check
    _
  $region31: #{classifier_forward.1} parent=0 // pred_check_branch
    %3009 = sbr.rel (0) target = $region33
  $region32: #{classifier_forward.1} parent=0 // pred_region
    _
  $region33: #{classifier_forward.1} parent=0 // pred_fallthru
    _
  // Predicated region
  $region34: #{classifier_forward.1} parent=0 // pred_check
    _
  $region35: #{classifier_forward.1} parent=0 // pred_check_branch
    %3011 = sbr.rel (0) target = $region37
  $region36: #{classifier_forward.1} parent=0 // pred_region
    _
  $region37: #{classifier_forward.1} parent=0 // pred_fallthru
    _

</llo_original>
